<compile_context>
chip_gen: v6e
topology: v6e:2x2x1
jax: 0.10.0
libtpu: 0.0.40
codegen_flags: <defaults>
</compile_context>

<pallas_src>
import math

import jax
import jax.numpy as jnp
from jax import lax
from jax.experimental import pallas as pl
from jax.experimental.pallas import tpu as pltpu


def _pick_tq(seq_len: int) -> int:
    """Largest query-tile size <= 256 that divides S (multiple of 8 when possible)."""
    for t in (256, 128, 64, 32, 16, 8):
        if seq_len % t == 0:
            return t
    return seq_len


def make_mha_kernel(n_heads: int, d_model: int, head_dim: int, tq: int, compute_dtype):
    """Kernel closed over static head count / model dim / head dim / query tile."""
    scale = 1.0 / math.sqrt(float(d_model))  # matches the PyTorch module (sqrt(d_model), NOT sqrt(head_dim))

    def mha_kernel(x_ref, wq_ref, bq_ref, wk_ref, bk_ref, wv_ref, bv_ref,
                   wo_ref, bo_ref, o_ref):
        qi = pl.program_id(1)

        # Full (S, D) slab for K/V; (TQ, D) query rows for this grid step.
        x_full = x_ref[0]                                   # (S, D)
        q_start = pl.multiple_of(qi * tq, tq)
        x_q = x_ref[0, pl.ds(q_start, tq), :]               # (TQ, D)

        xkv_c = x_full.astype(compute_dtype)
        xq_c = x_q.astype(compute_dtype)

        # Batched projections: one big matmul each, heads stacked along the columns.
        q_all = jnp.dot(xq_c, wq_ref[...], preferred_element_type=jnp.float32) + bq_ref[...]   # (TQ, D)
        k_all = jnp.dot(xkv_c, wk_ref[...], preferred_element_type=jnp.float32) + bk_ref[...]  # (S,  D)
        v_all = jnp.dot(xkv_c, wv_ref[...], preferred_element_type=jnp.float32) + bv_ref[...]  # (S,  D)

        acc = jnp.zeros((tq, d_model), jnp.float32)

        for h in range(n_heads):  # static unrolled loop over heads
            lo = h * head_dim
            hi = lo + head_dim
            qh = q_all[:, lo:hi]                             # (TQ, hd)
            kh = k_all[:, lo:hi]                             # (S,  hd)
            vh = v_all[:, lo:hi]                             # (S,  hd)

            # q . k^T with the transpose folded into the contraction (no XLU transpose).
            s = lax.dot_general(qh, kh, (((1,), (1,)), ((), ())),
                                preferred_element_type=jnp.float32) * scale   # (TQ, S)

            s = s - jnp.max(s, axis=-1, keepdims=True)
            p = jnp.exp(s)
            w = p * pl.reciprocal(jnp.sum(p, axis=-1, keepdims=True), approx=True)

            oh = jnp.dot(w.astype(compute_dtype), vh.astype(compute_dtype),
                         preferred_element_type=jnp.float32)                  # (TQ, hd)

            # Fold head output straight into the output projection (no concat).
            acc = acc + jnp.dot(oh.astype(compute_dtype), wo_ref[lo:hi, :],
                                preferred_element_type=jnp.float32)           # (TQ, D)

        o_ref[0] = (acc + bo_ref[...]).astype(o_ref.dtype)

    return mha_kernel


def multi_head_attention(x, params, n_heads, compute_dtype=jnp.float32):
    """x: (B, S, D) float32. params: dict of per-head weights (see init_params)."""
    B, S, D = x.shape
    hd = D // n_heads
    tq = _pick_tq(S)
    num_qt = S // tq

    # Pack per-head weights into lane-dense (D, D) / (1, D) slabs in the wrapper.
    # wq[h] (D, hd) -> columns [h*hd : (h+1)*hd] of a (D, D) matrix.
    def pack_w(w):  # (H, D, hd) -> (D, H*hd) = (D, D)
        return jnp.transpose(w, (1, 0, 2)).reshape(D, D).astype(compute_dtype)

    def pack_b(b):  # (H, 1, hd) -> (1, H*hd) = (1, D), kept f32 (post-matmul add)
        return b.reshape(1, D).astype(jnp.float32)

    wq = pack_w(params["wq"]); bq = pack_b(params["bq"])
    wk = pack_w(params["wk"]); bk = pack_b(params["bk"])
    wv = pack_w(params["wv"]); bv = pack_b(params["bv"])
    wo = params["wo"].astype(compute_dtype)                 # (D, D)
    bo = params["bo"].astype(jnp.float32)                   # (1, D)

    kernel = make_mha_kernel(n_heads, D, hd, tq, compute_dtype)

    w_spec = pl.BlockSpec((D, D), lambda b, q: (0, 0))
    b_spec = pl.BlockSpec((1, D), lambda b, q: (0, 0))

    return pl.pallas_call(
        kernel,
        out_shape=jax.ShapeDtypeStruct((B, S, D), x.dtype),
        grid_spec=pltpu.PrefetchScalarGridSpec(
            num_scalar_prefetch=0,
            grid=(B, num_qt),
            in_specs=[
                pl.BlockSpec((1, S, D), lambda b, q: (b, 0, 0)),   # x (full seq for K/V)
                w_spec, b_spec,                                     # wq, bq
                w_spec, b_spec,                                     # wk, bk
                w_spec, b_spec,                                     # wv, bv
                w_spec, b_spec,                                     # wo, bo
            ],
            out_specs=pl.BlockSpec((1, tq, D), lambda b, q: (b, q, 0)),
        ),
        compiler_params=pltpu.CompilerParams(
            dimension_semantics=("parallel", "parallel"),
            vmem_limit_bytes=48 * 1024 * 1024),
    )(x, wq, bq, wk, bk, wv, bv, wo, bo)


def init_params(key, embedding_dim, n_heads):
    """Deterministic init mirroring nn.Linear shapes (stored pre-transposed: x @ W + b)."""
    D = embedding_dim
    hd = D // n_heads
    keys = jax.random.split(key, 8)
    bound = 1.0 / math.sqrt(D)
    params = {
        "wq": jax.random.uniform(keys[0], (n_heads, D, hd), jnp.float32, -bound, bound),
        "bq": jax.random.uniform(keys[1], (n_heads, 1, hd), jnp.float32, -bound, bound),
        "wk": jax.random.uniform(keys[2], (n_heads, D, hd), jnp.float32, -bound, bound),
        "bk": jax.random.uniform(keys[3], (n_heads, 1, hd), jnp.float32, -bound, bound),
        "wv": jax.random.uniform(keys[4], (n_heads, D, hd), jnp.float32, -bound, bound),
        "bv": jax.random.uniform(keys[5], (n_heads, 1, hd), jnp.float32, -bound, bound),
        "wo": jax.random.uniform(keys[6], (D, D), jnp.float32, -bound, bound),
        "bo": jax.random.uniform(keys[7], (1, D), jnp.float32, -bound, bound),
    }
    return params


def reference_mha(x, params, n_heads):
    """Pure-JAX reference of the PyTorch forward semantics."""
    B, S, D = x.shape
    head_outs = []
    for h in range(n_heads):
        q = x @ params["wq"][h] + params["bq"][h]
        k = x @ params["wk"][h] + params["bk"][h]
        v = x @ params["wv"][h] + params["bv"][h]
        s = jnp.einsum("bqd,bkd->bqk", q, k) / math.sqrt(float(D))
        w = jax.nn.softmax(s, axis=-1)
        head_outs.append(jnp.einsum("bqk,bkd->bqd", w, v))
    concat = jnp.concatenate(head_outs, axis=-1)
    return concat @ params["wo"] + params["bo"]


if __name__ == "__main__":
    B, S, D, H = 2, 8, 32, 4

    key = jax.random.PRNGKey(0)
    k_x, k_p = jax.random.split(key)
    x = jax.random.normal(k_x, (B, S, D), dtype=jnp.float32)
    params = init_params(k_p, D, H)

    out = multi_head_attention(x, params, H)
    out = jax.block_until_ready(out)

    ref = reference_mha(x, params, H)
    assert out.shape == (B, S, D)
    # Tolerance accounts for the EUP approximate reciprocal in the softmax denominator.
    assert jnp.allclose(out, ref, atol=2e-3, rtol=2e-3), "mismatch vs reference"

    print("KERNEL_OK")
</pallas_src>

<mosaic_0001>
module attributes {stable_mosaic.version = 11 : i64} {
  func.func @mha_kernel(%arg0: i32, %arg1: i32, %arg2: memref<1x8x32xf32, #tpu.memory_space<vmem>>, %arg3: memref<32x32xf32, #tpu.memory_space<vmem>>, %arg4: memref<1x32xf32, #tpu.memory_space<vmem>>, %arg5: memref<32x32xf32, #tpu.memory_space<vmem>>, %arg6: memref<1x32xf32, #tpu.memory_space<vmem>>, %arg7: memref<32x32xf32, #tpu.memory_space<vmem>>, %arg8: memref<1x32xf32, #tpu.memory_space<vmem>>, %arg9: memref<32x32xf32, #tpu.memory_space<vmem>>, %arg10: memref<1x32xf32, #tpu.memory_space<vmem>>, %arg11: memref<1x8x32xf32, #tpu.memory_space<vmem>>) attributes {dimension_semantics = [#tpu.dimension_semantics<parallel>, #tpu.dimension_semantics<parallel>], iteration_bounds = array<i64: 2, 1>, scalar_prefetch = 0 : i64, scratch_operands = 0 : i64, tpu.core_type = #tpu.core_type<tc>, window_params = [{transform_indices = @transform_0, window_bounds = array<i64: 1, 8, 32>}, {pipeline_mode = #tpu.pipeline_mode<synchronous>, transform_indices = @transform_1, window_bounds = array<i64: 32, 32>}, {pipeline_mode = #tpu.pipeline_mode<synchronous>, transform_indices = @transform_2, window_bounds = array<i64: 1, 32>}, {pipeline_mode = #tpu.pipeline_mode<synchronous>, transform_indices = @transform_3, window_bounds = array<i64: 32, 32>}, {pipeline_mode = #tpu.pipeline_mode<synchronous>, transform_indices = @transform_4, window_bounds = array<i64: 1, 32>}, {pipeline_mode = #tpu.pipeline_mode<synchronous>, transform_indices = @transform_5, window_bounds = array<i64: 32, 32>}, {pipeline_mode = #tpu.pipeline_mode<synchronous>, transform_indices = @transform_6, window_bounds = array<i64: 1, 32>}, {pipeline_mode = #tpu.pipeline_mode<synchronous>, transform_indices = @transform_7, window_bounds = array<i64: 32, 32>}, {pipeline_mode = #tpu.pipeline_mode<synchronous>, transform_indices = @transform_8, window_bounds = array<i64: 1, 32>}, {transform_indices = @transform_9, window_bounds = array<i64: 1, 8, 32>}]} {
    %c0 = arith.constant 0 : index
    %c0_0 = arith.constant 0 : index
    %c0_1 = arith.constant 0 : index
    %0 = vector.load %arg2[%c0, %c0_0, %c0_1] : memref<1x8x32xf32, #tpu.memory_space<vmem>>, vector<1x8x32xf32>
    %1 = vector.shape_cast %0 : vector<1x8x32xf32> to vector<8x32xf32>
    %c8_i32 = arith.constant 8 : i32
    %2 = arith.muli %arg1, %c8_i32 : i32
    %3 = tpu.assume_multiple %2, 8 : i32
    %c0_2 = arith.constant 0 : index
    %4 = arith.index_cast %3 : i32 to index
    %c0_3 = arith.constant 0 : index
    %5 = vector.load %arg2[%c0_2, %4, %c0_3] : memref<1x8x32xf32, #tpu.memory_space<vmem>>, vector<1x8x32xf32>
    %6 = vector.shape_cast %5 : vector<1x8x32xf32> to vector<8x32xf32>
    %c0_4 = arith.constant 0 : index
    %c0_5 = arith.constant 0 : index
    %7 = vector.load %arg3[%c0_4, %c0_5] : memref<32x32xf32, #tpu.memory_space<vmem>>, vector<32x32xf32>
    %cst = arith.constant dense<0.000000e+00> : vector<8x32xf32>
    %8 = tpu.matmul %6, %7, %cst {dimension_numbers = #tpu.dot_dimension_numbers<[1], [0], [0], [1], [0, 0, 1, 1], [], []>} : vector<8x32xf32>, vector<32x32xf32>, vector<8x32xf32> -> vector<8x32xf32>
    %c0_6 = arith.constant 0 : index
    %c0_7 = arith.constant 0 : index
    %9 = vector.load %arg4[%c0_6, %c0_7] : memref<1x32xf32, #tpu.memory_space<vmem>>, vector<1x32xf32>
    %10 = vector.broadcast %9 : vector<1x32xf32> to vector<8x32xf32>
    %11 = arith.addf %8, %10 : vector<8x32xf32>
    %c0_8 = arith.constant 0 : index
    %c0_9 = arith.constant 0 : index
    %12 = vector.load %arg5[%c0_8, %c0_9] : memref<32x32xf32, #tpu.memory_space<vmem>>, vector<32x32xf32>
    %cst_10 = arith.constant dense<0.000000e+00> : vector<8x32xf32>
    %13 = tpu.matmul %1, %12, %cst_10 {dimension_numbers = #tpu.dot_dimension_numbers<[1], [0], [0], [1], [0, 0, 1, 1], [], []>} : vector<8x32xf32>, vector<32x32xf32>, vector<8x32xf32> -> vector<8x32xf32>
    %c0_11 = arith.constant 0 : index
    %c0_12 = arith.constant 0 : index
    %14 = vector.load %arg6[%c0_11, %c0_12] : memref<1x32xf32, #tpu.memory_space<vmem>>, vector<1x32xf32>
    %15 = vector.broadcast %14 : vector<1x32xf32> to vector<8x32xf32>
    %16 = arith.addf %13, %15 : vector<8x32xf32>
    %c0_13 = arith.constant 0 : index
    %c0_14 = arith.constant 0 : index
    %17 = vector.load %arg7[%c0_13, %c0_14] : memref<32x32xf32, #tpu.memory_space<vmem>>, vector<32x32xf32>
    %cst_15 = arith.constant dense<0.000000e+00> : vector<8x32xf32>
    %18 = tpu.matmul %1, %17, %cst_15 {dimension_numbers = #tpu.dot_dimension_numbers<[1], [0], [0], [1], [0, 0, 1, 1], [], []>} : vector<8x32xf32>, vector<32x32xf32>, vector<8x32xf32> -> vector<8x32xf32>
    %c0_16 = arith.constant 0 : index
    %c0_17 = arith.constant 0 : index
    %19 = vector.load %arg8[%c0_16, %c0_17] : memref<1x32xf32, #tpu.memory_space<vmem>>, vector<1x32xf32>
    %20 = vector.broadcast %19 : vector<1x32xf32> to vector<8x32xf32>
    %21 = arith.addf %18, %20 : vector<8x32xf32>
    %cst_18 = arith.constant 0.000000e+00 : f32
    %22 = vector.broadcast %cst_18 : f32 to vector<8x32xf32>
    %23 = vector.extract_strided_slice %11 {offsets = [0, 0], sizes = [8, 8], strides = [1, 1]} : vector<8x32xf32> to vector<8x8xf32>
    %24 = vector.extract_strided_slice %16 {offsets = [0, 0], sizes = [8, 8], strides = [1, 1]} : vector<8x32xf32> to vector<8x8xf32>
    %25 = vector.extract_strided_slice %21 {offsets = [0, 0], sizes = [8, 8], strides = [1, 1]} : vector<8x32xf32> to vector<8x8xf32>
    %cst_19 = arith.constant dense<0.000000e+00> : vector<8x8xf32>
    %26 = tpu.matmul %23, %24, %cst_19 {dimension_numbers = #tpu.dot_dimension_numbers<[1], [1], [0], [0], [0, 0, 1, 0], [], []>} : vector<8x8xf32>, vector<8x8xf32>, vector<8x8xf32> -> vector<8x8xf32>
    %cst_20 = arith.constant 0.176776692 : f32
    %27 = vector.broadcast %cst_20 : f32 to vector<8x8xf32>
    %28 = arith.mulf %26, %27 : vector<8x8xf32>
    %cst_21 = arith.constant dense<0xFF800000> : vector<8xf32>
    %29 = vector.multi_reduction <maximumf>, %28, %cst_21 [1] : vector<8x8xf32> to vector<8xf32>
    %30 = vector.shape_cast %29 : vector<8xf32> to vector<8x1xf32>
    %31 = vector.broadcast %30 : vector<8x1xf32> to vector<8x8xf32>
    %32 = arith.subf %28, %31 : vector<8x8xf32>
    %33 = math.exp %32 : vector<8x8xf32>
    %cst_22 = arith.constant dense<0.000000e+00> : vector<8xf32>
    %34 = vector.multi_reduction <add>, %33, %cst_22 [1] : vector<8x8xf32> to vector<8xf32>
    %35 = vector.shape_cast %34 : vector<8xf32> to vector<8x1xf32>
    %36 = tpu.reciprocal %35 {approx = true} : vector<8x1xf32> -> vector<8x1xf32>
    %37 = vector.broadcast %36 : vector<8x1xf32> to vector<8x8xf32>
    %38 = arith.mulf %33, %37 : vector<8x8xf32>
    %cst_23 = arith.constant dense<0.000000e+00> : vector<8x8xf32>
    %39 = tpu.matmul %38, %25, %cst_23 {dimension_numbers = #tpu.dot_dimension_numbers<[1], [0], [0], [1], [0, 0, 1, 1], [], []>} : vector<8x8xf32>, vector<8x8xf32>, vector<8x8xf32> -> vector<8x8xf32>
    %c0_24 = arith.constant 0 : index
    %c0_25 = arith.constant 0 : index
    %40 = vector.load %arg9[%c0_24, %c0_25] : memref<32x32xf32, #tpu.memory_space<vmem>>, vector<8x32xf32>
    %cst_26 = arith.constant dense<0.000000e+00> : vector<8x32xf32>
    %41 = tpu.matmul %39, %40, %cst_26 {dimension_numbers = #tpu.dot_dimension_numbers<[1], [0], [0], [1], [0, 0, 1, 1], [], []>} : vector<8x8xf32>, vector<8x32xf32>, vector<8x32xf32> -> vector<8x32xf32>
    %42 = arith.addf %22, %41 : vector<8x32xf32>
    %43 = vector.extract_strided_slice %11 {offsets = [0, 8], sizes = [8, 8], strides = [1, 1]} : vector<8x32xf32> to vector<8x8xf32>
    %44 = vector.extract_strided_slice %16 {offsets = [0, 8], sizes = [8, 8], strides = [1, 1]} : vector<8x32xf32> to vector<8x8xf32>
    %45 = vector.extract_strided_slice %21 {offsets = [0, 8], sizes = [8, 8], strides = [1, 1]} : vector<8x32xf32> to vector<8x8xf32>
    %cst_27 = arith.constant dense<0.000000e+00> : vector<8x8xf32>
    %46 = tpu.matmul %43, %44, %cst_27 {dimension_numbers = #tpu.dot_dimension_numbers<[1], [1], [0], [0], [0, 0, 1, 0], [], []>} : vector<8x8xf32>, vector<8x8xf32>, vector<8x8xf32> -> vector<8x8xf32>
    %cst_28 = arith.constant 0.176776692 : f32
    %47 = vector.broadcast %cst_28 : f32 to vector<8x8xf32>
    %48 = arith.mulf %46, %47 : vector<8x8xf32>
    %cst_29 = arith.constant dense<0xFF800000> : vector<8xf32>
    %49 = vector.multi_reduction <maximumf>, %48, %cst_29 [1] : vector<8x8xf32> to vector<8xf32>
    %50 = vector.shape_cast %49 : vector<8xf32> to vector<8x1xf32>
    %51 = vector.broadcast %50 : vector<8x1xf32> to vector<8x8xf32>
    %52 = arith.subf %48, %51 : vector<8x8xf32>
    %53 = math.exp %52 : vector<8x8xf32>
    %cst_30 = arith.constant dense<0.000000e+00> : vector<8xf32>
    %54 = vector.multi_reduction <add>, %53, %cst_30 [1] : vector<8x8xf32> to vector<8xf32>
    %55 = vector.shape_cast %54 : vector<8xf32> to vector<8x1xf32>
    %56 = tpu.reciprocal %55 {approx = true} : vector<8x1xf32> -> vector<8x1xf32>
    %57 = vector.broadcast %56 : vector<8x1xf32> to vector<8x8xf32>
    %58 = arith.mulf %53, %57 : vector<8x8xf32>
    %cst_31 = arith.constant dense<0.000000e+00> : vector<8x8xf32>
    %59 = tpu.matmul %58, %45, %cst_31 {dimension_numbers = #tpu.dot_dimension_numbers<[1], [0], [0], [1], [0, 0, 1, 1], [], []>} : vector<8x8xf32>, vector<8x8xf32>, vector<8x8xf32> -> vector<8x8xf32>
    %c8 = arith.constant 8 : index
    %c0_32 = arith.constant 0 : index
    %60 = vector.load %arg9[%c8, %c0_32] : memref<32x32xf32, #tpu.memory_space<vmem>>, vector<8x32xf32>
    %cst_33 = arith.constant dense<0.000000e+00> : vector<8x32xf32>
    %61 = tpu.matmul %59, %60, %cst_33 {dimension_numbers = #tpu.dot_dimension_numbers<[1], [0], [0], [1], [0, 0, 1, 1], [], []>} : vector<8x8xf32>, vector<8x32xf32>, vector<8x32xf32> -> vector<8x32xf32>
    %62 = arith.addf %42, %61 : vector<8x32xf32>
    %63 = vector.extract_strided_slice %11 {offsets = [0, 16], sizes = [8, 8], strides = [1, 1]} : vector<8x32xf32> to vector<8x8xf32>
    %64 = vector.extract_strided_slice %16 {offsets = [0, 16], sizes = [8, 8], strides = [1, 1]} : vector<8x32xf32> to vector<8x8xf32>
    %65 = vector.extract_strided_slice %21 {offsets = [0, 16], sizes = [8, 8], strides = [1, 1]} : vector<8x32xf32> to vector<8x8xf32>
    %cst_34 = arith.constant dense<0.000000e+00> : vector<8x8xf32>
    %66 = tpu.matmul %63, %64, %cst_34 {dimension_numbers = #tpu.dot_dimension_numbers<[1], [1], [0], [0], [0, 0, 1, 0], [], []>} : vector<8x8xf32>, vector<8x8xf32>, vector<8x8xf32> -> vector<8x8xf32>
    %cst_35 = arith.constant 0.176776692 : f32
    %67 = vector.broadcast %cst_35 : f32 to vector<8x8xf32>
    %68 = arith.mulf %66, %67 : vector<8x8xf32>
    %cst_36 = arith.constant dense<0xFF800000> : vector<8xf32>
    %69 = vector.multi_reduction <maximumf>, %68, %cst_36 [1] : vector<8x8xf32> to vector<8xf32>
    %70 = vector.shape_cast %69 : vector<8xf32> to vector<8x1xf32>
    %71 = vector.broadcast %70 : vector<8x1xf32> to vector<8x8xf32>
    %72 = arith.subf %68, %71 : vector<8x8xf32>
    %73 = math.exp %72 : vector<8x8xf32>
    %cst_37 = arith.constant dense<0.000000e+00> : vector<8xf32>
    %74 = vector.multi_reduction <add>, %73, %cst_37 [1] : vector<8x8xf32> to vector<8xf32>
    %75 = vector.shape_cast %74 : vector<8xf32> to vector<8x1xf32>
    %76 = tpu.reciprocal %75 {approx = true} : vector<8x1xf32> -> vector<8x1xf32>
    %77 = vector.broadcast %76 : vector<8x1xf32> to vector<8x8xf32>
    %78 = arith.mulf %73, %77 : vector<8x8xf32>
    %cst_38 = arith.constant dense<0.000000e+00> : vector<8x8xf32>
    %79 = tpu.matmul %78, %65, %cst_38 {dimension_numbers = #tpu.dot_dimension_numbers<[1], [0], [0], [1], [0, 0, 1, 1], [], []>} : vector<8x8xf32>, vector<8x8xf32>, vector<8x8xf32> -> vector<8x8xf32>
    %c16 = arith.constant 16 : index
    %c0_39 = arith.constant 0 : index
    %80 = vector.load %arg9[%c16, %c0_39] : memref<32x32xf32, #tpu.memory_space<vmem>>, vector<8x32xf32>
    %cst_40 = arith.constant dense<0.000000e+00> : vector<8x32xf32>
    %81 = tpu.matmul %79, %80, %cst_40 {dimension_numbers = #tpu.dot_dimension_numbers<[1], [0], [0], [1], [0, 0, 1, 1], [], []>} : vector<8x8xf32>, vector<8x32xf32>, vector<8x32xf32> -> vector<8x32xf32>
    %82 = arith.addf %62, %81 : vector<8x32xf32>
    %83 = vector.extract_strided_slice %11 {offsets = [0, 24], sizes = [8, 8], strides = [1, 1]} : vector<8x32xf32> to vector<8x8xf32>
    %84 = vector.extract_strided_slice %16 {offsets = [0, 24], sizes = [8, 8], strides = [1, 1]} : vector<8x32xf32> to vector<8x8xf32>
    %85 = vector.extract_strided_slice %21 {offsets = [0, 24], sizes = [8, 8], strides = [1, 1]} : vector<8x32xf32> to vector<8x8xf32>
    %cst_41 = arith.constant dense<0.000000e+00> : vector<8x8xf32>
    %86 = tpu.matmul %83, %84, %cst_41 {dimension_numbers = #tpu.dot_dimension_numbers<[1], [1], [0], [0], [0, 0, 1, 0], [], []>} : vector<8x8xf32>, vector<8x8xf32>, vector<8x8xf32> -> vector<8x8xf32>
    %cst_42 = arith.constant 0.176776692 : f32
    %87 = vector.broadcast %cst_42 : f32 to vector<8x8xf32>
    %88 = arith.mulf %86, %87 : vector<8x8xf32>
    %cst_43 = arith.constant dense<0xFF800000> : vector<8xf32>
    %89 = vector.multi_reduction <maximumf>, %88, %cst_43 [1] : vector<8x8xf32> to vector<8xf32>
    %90 = vector.shape_cast %89 : vector<8xf32> to vector<8x1xf32>
    %91 = vector.broadcast %90 : vector<8x1xf32> to vector<8x8xf32>
    %92 = arith.subf %88, %91 : vector<8x8xf32>
    %93 = math.exp %92 : vector<8x8xf32>
    %cst_44 = arith.constant dense<0.000000e+00> : vector<8xf32>
    %94 = vector.multi_reduction <add>, %93, %cst_44 [1] : vector<8x8xf32> to vector<8xf32>
    %95 = vector.shape_cast %94 : vector<8xf32> to vector<8x1xf32>
    %96 = tpu.reciprocal %95 {approx = true} : vector<8x1xf32> -> vector<8x1xf32>
    %97 = vector.broadcast %96 : vector<8x1xf32> to vector<8x8xf32>
    %98 = arith.mulf %93, %97 : vector<8x8xf32>
    %cst_45 = arith.constant dense<0.000000e+00> : vector<8x8xf32>
    %99 = tpu.matmul %98, %85, %cst_45 {dimension_numbers = #tpu.dot_dimension_numbers<[1], [0], [0], [1], [0, 0, 1, 1], [], []>} : vector<8x8xf32>, vector<8x8xf32>, vector<8x8xf32> -> vector<8x8xf32>
    %c24 = arith.constant 24 : index
    %c0_46 = arith.constant 0 : index
    %100 = vector.load %arg9[%c24, %c0_46] : memref<32x32xf32, #tpu.memory_space<vmem>>, vector<8x32xf32>
    %cst_47 = arith.constant dense<0.000000e+00> : vector<8x32xf32>
    %101 = tpu.matmul %99, %100, %cst_47 {dimension_numbers = #tpu.dot_dimension_numbers<[1], [0], [0], [1], [0, 0, 1, 1], [], []>} : vector<8x8xf32>, vector<8x32xf32>, vector<8x32xf32> -> vector<8x32xf32>
    %102 = arith.addf %82, %101 : vector<8x32xf32>
    %c0_48 = arith.constant 0 : index
    %c0_49 = arith.constant 0 : index
    %103 = vector.load %arg10[%c0_48, %c0_49] : memref<1x32xf32, #tpu.memory_space<vmem>>, vector<1x32xf32>
    %104 = vector.broadcast %103 : vector<1x32xf32> to vector<8x32xf32>
    %105 = arith.addf %102, %104 : vector<8x32xf32>
    %c0_50 = arith.constant 0 : index
    %c0_51 = arith.constant 0 : index
    %c0_52 = arith.constant 0 : index
    %106 = vector.load %arg11[%c0_50, %c0_51, %c0_52] : memref<1x8x32xf32, #tpu.memory_space<vmem>>, vector<1x8x32xf32>
    %107 = vector.shape_cast %106 : vector<1x8x32xf32> to vector<8x32xf32>
    %108 = vector.shape_cast %105 : vector<8x32xf32> to vector<1x8x32xf32>
    tpu.vector_store %arg11[%c0_50, %c0_51, %c0_52], %108 {strides = array<i32>} : memref<1x8x32xf32, #tpu.memory_space<vmem>>, vector<1x8x32xf32>,
    return
  }
  func.func @transform_0(%arg0: i32, %arg1: i32) -> (i32, i32, i32) {
    %c0_i32 = arith.constant 0 : i32
    %c0_i32_0 = arith.constant 0 : i32
    %c0_i32_1 = arith.constant 0 : i32
    return %arg0, %c0_i32, %c0_i32_0 : i32, i32, i32
  }
  func.func @transform_1(%arg0: i32, %arg1: i32) -> (i32, i32) {
    %c0_i32 = arith.constant 0 : i32
    %c0_i32_0 = arith.constant 0 : i32
    %c0_i32_1 = arith.constant 0 : i32
    return %c0_i32, %c0_i32_0 : i32, i32
  }
  func.func @transform_2(%arg0: i32, %arg1: i32) -> (i32, i32) {
    %c0_i32 = arith.constant 0 : i32
    %c0_i32_0 = arith.constant 0 : i32
    %c0_i32_1 = arith.constant 0 : i32
    return %c0_i32, %c0_i32_0 : i32, i32
  }
  func.func @transform_3(%arg0: i32, %arg1: i32) -> (i32, i32) {
    %c0_i32 = arith.constant 0 : i32
    %c0_i32_0 = arith.constant 0 : i32
    %c0_i32_1 = arith.constant 0 : i32
    return %c0_i32, %c0_i32_0 : i32, i32
  }
  func.func @transform_4(%arg0: i32, %arg1: i32) -> (i32, i32) {
    %c0_i32 = arith.constant 0 : i32
    %c0_i32_0 = arith.constant 0 : i32
    %c0_i32_1 = arith.constant 0 : i32
    return %c0_i32, %c0_i32_0 : i32, i32
  }
  func.func @transform_5(%arg0: i32, %arg1: i32) -> (i32, i32) {
    %c0_i32 = arith.constant 0 : i32
    %c0_i32_0 = arith.constant 0 : i32
    %c0_i32_1 = arith.constant 0 : i32
    return %c0_i32, %c0_i32_0 : i32, i32
  }
  func.func @transform_6(%arg0: i32, %arg1: i32) -> (i32, i32) {
    %c0_i32 = arith.constant 0 : i32
    %c0_i32_0 = arith.constant 0 : i32
    %c0_i32_1 = arith.constant 0 : i32
    return %c0_i32, %c0_i32_0 : i32, i32
  }
  func.func @transform_7(%arg0: i32, %arg1: i32) -> (i32, i32) {
    %c0_i32 = arith.constant 0 : i32
    %c0_i32_0 = arith.constant 0 : i32
    %c0_i32_1 = arith.constant 0 : i32
    return %c0_i32, %c0_i32_0 : i32, i32
  }
  func.func @transform_8(%arg0: i32, %arg1: i32) -> (i32, i32) {
    %c0_i32 = arith.constant 0 : i32
    %c0_i32_0 = arith.constant 0 : i32
    %c0_i32_1 = arith.constant 0 : i32
    return %c0_i32, %c0_i32_0 : i32, i32
  }
  func.func @transform_9(%arg0: i32, %arg1: i32) -> (i32, i32, i32) {
    %c0_i32 = arith.constant 0 : i32
    %c0_i32_0 = arith.constant 0 : i32
    return %arg0, %arg1, %c0_i32 : i32, i32, i32
  }
}

</mosaic_0001>

<llo_original>
// kernel: tpu_custom_call.1
$region0: #{tpu_custom_call.1}
  #allocation0 [shape = 'u32[]', space=smem, size = 0x4, offset = 0x4, fixed_abs, tag = 'smem constant byte address 0x4 - core index']
  #allocation1 [shape = 'u32[144,128]{1,0:T(1,128)}', space=vmem, size = 0x12000, scoped, tag = 'internal scratch']
  %s0 = inlined_call_operand.hbm [shape: f32[2,8,32], index: 0, kind: input, shape index: {}]
  %s1 = inlined_call_operand.hbm [shape: f32[32,32], index: 1, kind: input, shape index: {}]
  %s2 = inlined_call_operand.vmem [shape: f32[1,32], index: 2, kind: input, shape index: {}]
  %s3 = inlined_call_operand.hbm [shape: f32[32,32], index: 3, kind: input, shape index: {}]
  %s4 = inlined_call_operand.vmem [shape: f32[1,32], index: 4, kind: input, shape index: {}]
  %s5 = inlined_call_operand.hbm [shape: f32[32,32], index: 5, kind: input, shape index: {}]
  %s6 = inlined_call_operand.vmem [shape: f32[1,32], index: 6, kind: input, shape index: {}]
  %s7 = inlined_call_operand.hbm [shape: f32[32,32], index: 7, kind: input, shape index: {}]
  %s8 = inlined_call_operand.vmem [shape: f32[1,32], index: 8, kind: input, shape index: {}]
  %s9 = inlined_call_operand.hbm [shape: f32[2,8,32], index: 9, kind: output, shape index: {}]
  %s10 = sld [smem:[#allocation0]]
  $region89: #{tpu_custom_call.1} parent=0
    _
  %s12 = ssub.s32 1, %s10
  %s13 = scalar_select 0, %s12, %s10
  $region1: #{tpu_custom_call.1} parent=0
    #allocation2 [shape = 'u8[8192]{0}', space=vmem, size = 0x2000, scoped, tag = 'input window, operand 0']
    #allocation3 [shape = 's32[2]{0}', space=sflag, size = 0x8, scoped, tag = 'scoped memory for tpu_custom_call.1']
    #allocation4 [shape = 's32[2]{0}', space=sflag, size = 0x8, scoped, tag = 'scoped memory for tpu_custom_call.1']
    #allocation5 [shape = 'u8[16384]{0}', space=vmem, size = 0x4000, scoped, tag = 'input window, operand 1, single buffered']
    #allocation6 [shape = 's32[1]{0}', space=sflag, size = 0x4, scoped, tag = 'scoped memory for tpu_custom_call.1']
    #allocation7 [shape = 'u8[16384]{0}', space=vmem, size = 0x4000, scoped, tag = 'input window, operand 3, single buffered']
    #allocation8 [shape = 'u8[16384]{0}', space=vmem, size = 0x4000, scoped, tag = 'input window, operand 5, single buffered']
    #allocation9 [shape = 's32[1]{0}', space=sflag, size = 0x4, scoped, tag = 'scoped memory for tpu_custom_call.1']
    #allocation10 [shape = 'u8[16384]{0}', space=vmem, size = 0x4000, scoped, tag = 'input window, operand 7, single buffered']
    #allocation11 [shape = 'u8[8192]{0}', space=vmem, size = 0x2000, scoped, tag = 'output window, operand 0']
    %14 = vsyncpa [#allocation3], 0
    %s15 = scalar_lea.sflag [#allocation3], 1
    %16 = vsyncpa %s15, 0
    %17 = vsyncpa [#allocation6], 0
    %18 = vsyncpa [#allocation9], 0
    %19 = vsyncpa [#allocation4], 0
    %s20 = scalar_lea.sflag [#allocation4], 1
    %21 = vsyncpa %s20, 0
    loop: start=0, step=1, limit=4
    $region2: #{tpu_custom_call.1} parent=1 // loop_pre_header
      _
    $region3: #{tpu_custom_call.1} parent=1 // loop_header
      %s23 = sphi 0, %s27
      %p24 = scmp.ge.s32.totalorder %s23, 4
      %s30 = sphi 0, %s42
      %s31 = sphi 0, %s38
      %s32 = sphi 0, %s30
      %s33 = sphi 0, %s31
      %s34 = sphi 0, %s32
      %s35 = sphi 0, %s33
      %s45 = sphi 0, %s47
      %s48 = sphi 0, %s45
      %s49 = sphi 0, %s48
      %s65 = sphi 0, %s49
      %s69 = sphi 0, %s69
      %s71 = sphi 0, %s69
      %s72 = sphi 0, %s71
      %s86 = sphi 0, %s72
      %s90 = sphi 0, %s90
      %s92 = sphi 0, %s90
      %s93 = sphi 0, %s92
      %s107 = sphi 0, %s93
      %s111 = sphi 0, %s111
      %s113 = sphi 0, %s111
      %s114 = sphi 0, %s113
      %s128 = sphi 0, %s114
      %s132 = sphi 0, %s132
      %s134 = sphi 0, %s132
      %s135 = sphi 0, %s134
      %s149 = sphi 0, %s135
      %s153 = sphi 0, %s153
      %s155 = sphi 0, %s153
      %s156 = sphi 0, %s155
      %s170 = sphi 0, %s156
      %s174 = sphi 0, %s174
      %s176 = sphi 0, %s174
      %s177 = sphi 0, %s176
      %s191 = sphi 0, %s177
      %s195 = sphi 0, %s195
      %s197 = sphi 0, %s195
      %s198 = sphi 0, %s197
      %s212 = sphi 0, %s198
      %s216 = sphi 0, %s216
      %s218 = sphi 0, %s216
      %s219 = sphi 0, %s218
      %s233 = sphi 0, %s219
      %s241 = sphi 0, %s243
      %s244 = sphi 0, %s241
      %s245 = sphi 0, %s244
      %s261 = sphi 0, %s245
    $region4: #{tpu_custom_call.1} parent=1 // loop_header_branch
      %26 = sbr.rel (%p24) target = $region8
    $region5: #{tpu_custom_call.1} parent=1 // loop_body
      %s28 = ssub.s32 %s23, 1
      %s29 = ssub.s32 %s23, 2
      %s36 = sadd.s32 1, %s31
      %p37 = scmp.ge.s32.totalorder %s36, 1
      %s38 = scalar_select %p37, 0, %s36
      %s39 = sadd.s32 1, %s30
      %s40 = scalar_select %p37, %s39, %s30
      %p41 = scmp.ge.s32.totalorder %s40, 2
      %s42 = scalar_select %p41, 0, %s40
      %s43 = ssub.s32 %s30, %s42
      %p44 = scmp.eq.s32.totalorder %s43, 0
      %s46 = sadd.s32 %s45, 1
      %s47 = scalar_select %p44, %s45, %s46
      %p50 = pneg %p44
      %p51 = scmp.eq.s32.totalorder %s23, 1
      %p52 = por %p50, %p51
      %p53 = scmp.ne.s32.totalorder %s45, %s48
      %p54 = scmp.eq.s32.totalorder %s23, 0
      %p55 = por %p53, %p54
      %p56 = scmp.ne.s32.totalorder %s45, %s48
      %p57 = scmp.eq.s32.totalorder %s28, 1
      %p58 = por %p56, %p57
      %p59 = scmp.ne.s32.totalorder %s48, %s49
      %p60 = scmp.eq.s32.totalorder %s28, 0
      %p61 = por %p59, %p60
      %p62 = scmp.ne.s32.totalorder %s48, %s49
      %p63 = scmp.eq.s32.totalorder %s29, 1
      %p64 = por %p62, %p63
      %p66 = scmp.ne.s32.totalorder %s49, %s65
      %p67 = scmp.eq.s32.totalorder %s29, 0
      %p68 = por %p66, %p67
      %s70 = sadd.s32 %s69, 1
      %p73 = scmp.eq.s32.totalorder %s23, 1
      %p74 = scmp.ne.s32.totalorder %s69, %s71
      %p75 = scmp.eq.s32.totalorder %s23, 0
      %p76 = por %p74, %p75
      %p77 = scmp.ne.s32.totalorder %s69, %s71
      %p78 = scmp.eq.s32.totalorder %s28, 1
      %p79 = por %p77, %p78
      %p80 = scmp.ne.s32.totalorder %s71, %s72
      %p81 = scmp.eq.s32.totalorder %s28, 0
      %p82 = por %p80, %p81
      %p83 = scmp.ne.s32.totalorder %s71, %s72
      %p84 = scmp.eq.s32.totalorder %s29, 1
      %p85 = por %p83, %p84
      %p87 = scmp.ne.s32.totalorder %s72, %s86
      %p88 = scmp.eq.s32.totalorder %s29, 0
      %p89 = por %p87, %p88
      %s91 = sadd.s32 %s90, 1
      %p94 = scmp.eq.s32.totalorder %s23, 1
      %p95 = scmp.ne.s32.totalorder %s90, %s92
      %p96 = scmp.eq.s32.totalorder %s23, 0
      %p97 = por %p95, %p96
      %p98 = scmp.ne.s32.totalorder %s90, %s92
      %p99 = scmp.eq.s32.totalorder %s28, 1
      %p100 = por %p98, %p99
      %p101 = scmp.ne.s32.totalorder %s92, %s93
      %p102 = scmp.eq.s32.totalorder %s28, 0
      %p103 = por %p101, %p102
      %p104 = scmp.ne.s32.totalorder %s92, %s93
      %p105 = scmp.eq.s32.totalorder %s29, 1
      %p106 = por %p104, %p105
      %p108 = scmp.ne.s32.totalorder %s93, %s107
      %p109 = scmp.eq.s32.totalorder %s29, 0
      %p110 = por %p108, %p109
      %s112 = sadd.s32 %s111, 1
      %p115 = scmp.eq.s32.totalorder %s23, 1
      %p116 = scmp.ne.s32.totalorder %s111, %s113
      %p117 = scmp.eq.s32.totalorder %s23, 0
      %p118 = por %p116, %p117
      %p119 = scmp.ne.s32.totalorder %s111, %s113
      %p120 = scmp.eq.s32.totalorder %s28, 1
      %p121 = por %p119, %p120
      %p122 = scmp.ne.s32.totalorder %s113, %s114
      %p123 = scmp.eq.s32.totalorder %s28, 0
      %p124 = por %p122, %p123
      %p125 = scmp.ne.s32.totalorder %s113, %s114
      %p126 = scmp.eq.s32.totalorder %s29, 1
      %p127 = por %p125, %p126
      %p129 = scmp.ne.s32.totalorder %s114, %s128
      %p130 = scmp.eq.s32.totalorder %s29, 0
      %p131 = por %p129, %p130
      %s133 = sadd.s32 %s132, 1
      %p136 = scmp.eq.s32.totalorder %s23, 1
      %p137 = scmp.ne.s32.totalorder %s132, %s134
      %p138 = scmp.eq.s32.totalorder %s23, 0
      %p139 = por %p137, %p138
      %p140 = scmp.ne.s32.totalorder %s132, %s134
      %p141 = scmp.eq.s32.totalorder %s28, 1
      %p142 = por %p140, %p141
      %p143 = scmp.ne.s32.totalorder %s134, %s135
      %p144 = scmp.eq.s32.totalorder %s28, 0
      %p145 = por %p143, %p144
      %p146 = scmp.ne.s32.totalorder %s134, %s135
      %p147 = scmp.eq.s32.totalorder %s29, 1
      %p148 = por %p146, %p147
      %p150 = scmp.ne.s32.totalorder %s135, %s149
      %p151 = scmp.eq.s32.totalorder %s29, 0
      %p152 = por %p150, %p151
      %s154 = sadd.s32 %s153, 1
      %p157 = scmp.eq.s32.totalorder %s23, 1
      %p158 = scmp.ne.s32.totalorder %s153, %s155
      %p159 = scmp.eq.s32.totalorder %s23, 0
      %p160 = por %p158, %p159
      %p161 = scmp.ne.s32.totalorder %s153, %s155
      %p162 = scmp.eq.s32.totalorder %s28, 1
      %p163 = por %p161, %p162
      %p164 = scmp.ne.s32.totalorder %s155, %s156
      %p165 = scmp.eq.s32.totalorder %s28, 0
      %p166 = por %p164, %p165
      %p167 = scmp.ne.s32.totalorder %s155, %s156
      %p168 = scmp.eq.s32.totalorder %s29, 1
      %p169 = por %p167, %p168
      %p171 = scmp.ne.s32.totalorder %s156, %s170
      %p172 = scmp.eq.s32.totalorder %s29, 0
      %p173 = por %p171, %p172
      %s175 = sadd.s32 %s174, 1
      %p178 = scmp.eq.s32.totalorder %s23, 1
      %p179 = scmp.ne.s32.totalorder %s174, %s176
      %p180 = scmp.eq.s32.totalorder %s23, 0
      %p181 = por %p179, %p180
      %p182 = scmp.ne.s32.totalorder %s174, %s176
      %p183 = scmp.eq.s32.totalorder %s28, 1
      %p184 = por %p182, %p183
      %p185 = scmp.ne.s32.totalorder %s176, %s177
      %p186 = scmp.eq.s32.totalorder %s28, 0
      %p187 = por %p185, %p186
      %p188 = scmp.ne.s32.totalorder %s176, %s177
      %p189 = scmp.eq.s32.totalorder %s29, 1
      %p190 = por %p188, %p189
      %p192 = scmp.ne.s32.totalorder %s177, %s191
      %p193 = scmp.eq.s32.totalorder %s29, 0
      %p194 = por %p192, %p193
      %s196 = sadd.s32 %s195, 1
      %p199 = scmp.eq.s32.totalorder %s23, 1
      %p200 = scmp.ne.s32.totalorder %s195, %s197
      %p201 = scmp.eq.s32.totalorder %s23, 0
      %p202 = por %p200, %p201
      %p203 = scmp.ne.s32.totalorder %s195, %s197
      %p204 = scmp.eq.s32.totalorder %s28, 1
      %p205 = por %p203, %p204
      %p206 = scmp.ne.s32.totalorder %s197, %s198
      %p207 = scmp.eq.s32.totalorder %s28, 0
      %p208 = por %p206, %p207
      %p209 = scmp.ne.s32.totalorder %s197, %s198
      %p210 = scmp.eq.s32.totalorder %s29, 1
      %p211 = por %p209, %p210
      %p213 = scmp.ne.s32.totalorder %s198, %s212
      %p214 = scmp.eq.s32.totalorder %s29, 0
      %p215 = por %p213, %p214
      %s217 = sadd.s32 %s216, 1
      %p220 = scmp.eq.s32.totalorder %s23, 1
      %p221 = scmp.ne.s32.totalorder %s216, %s218
      %p222 = scmp.eq.s32.totalorder %s23, 0
      %p223 = por %p221, %p222
      %p224 = scmp.ne.s32.totalorder %s216, %s218
      %p225 = scmp.eq.s32.totalorder %s28, 1
      %p226 = por %p224, %p225
      %p227 = scmp.ne.s32.totalorder %s218, %s219
      %p228 = scmp.eq.s32.totalorder %s28, 0
      %p229 = por %p227, %p228
      %p230 = scmp.ne.s32.totalorder %s218, %s219
      %p231 = scmp.eq.s32.totalorder %s29, 1
      %p232 = por %p230, %p231
      %p234 = scmp.ne.s32.totalorder %s219, %s233
      %p235 = scmp.eq.s32.totalorder %s29, 0
      %p236 = por %p234, %p235
      %s237 = ssub.s32 %s30, %s42
      %s238 = ssub.s32 %s31, %s38
      %s239 = sor.u32 %s237, %s238
      %p240 = scmp.eq.s32.totalorder %s239, 0
      %s242 = sadd.s32 %s241, 1
      %s243 = scalar_select %p240, %s241, %s242
      %p246 = pneg %p240
      %p247 = scmp.eq.s32.totalorder %s23, 1
      %p248 = por %p246, %p247
      %p249 = scmp.ne.s32.totalorder %s241, %s244
      %p250 = scmp.eq.s32.totalorder %s23, 0
      %p251 = por %p249, %p250
      %p252 = scmp.ne.s32.totalorder %s241, %s244
      %p253 = scmp.eq.s32.totalorder %s28, 1
      %p254 = por %p252, %p253
      %p255 = scmp.ne.s32.totalorder %s244, %s245
      %p256 = scmp.eq.s32.totalorder %s28, 0
      %p257 = por %p255, %p256
      %p258 = scmp.ne.s32.totalorder %s244, %s245
      %p259 = scmp.eq.s32.totalorder %s29, 1
      %p260 = por %p258, %p259
      %p262 = scmp.ne.s32.totalorder %s245, %s261
      %p263 = scmp.eq.s32.totalorder %s29, 0
      %p264 = por %p262, %p263
      %p265 = scmp.le.s32.totalorder 1, %s23
      %p266 = scmp.lt.s32.totalorder %s23, 3
      %p267 = pnand %p265, %p266
      %p268 = pneg %p267
      // Predicated region
      $region9: #{tpu_custom_call.1} parent=5 // pred_check
        _
      $region10: #{tpu_custom_call.1} parent=5 // pred_check_branch
        %270 = sbr.rel (%p267) target = $region12
      $region11: #{tpu_custom_call.1} parent=5 // pred_region
        %s271 = ssub.s32 %s23, 1
        // Predicated region
        $region13: #{tpu_custom_call.1} parent=11 // pred_check
          %p272 = pneg %p82
        $region14: #{tpu_custom_call.1} parent=11 // pred_check_branch
          %274 = sbr.rel (%p272) target = $region16
        $region15: #{tpu_custom_call.1} parent=11 // pred_region
          %s276 = ssub.s32 512, 512
          %277 = vsyncadd [#allocation6], %s276
          %s278 = sshll.u32 [#allocation5], 4
          %s279 = int_to_ptr.vmem [resolvable:$true] %s278
          %284 = dma.hbm_to_vmem [thread:$0]  %s1, 512, %s279, [#allocation6], 128, 128, 8
        $region16: #{tpu_custom_call.1} parent=11 // pred_fallthru
          _
        // Predicated region
        $region17: #{tpu_custom_call.1} parent=11 // pred_check
          %p285 = pneg %p103
        $region18: #{tpu_custom_call.1} parent=11 // pred_check_branch
          %287 = sbr.rel (%p285) target = $region20
        $region19: #{tpu_custom_call.1} parent=11 // pred_region
          _
        $region20: #{tpu_custom_call.1} parent=11 // pred_fallthru
          _
        // Predicated region
        $region21: #{tpu_custom_call.1} parent=11 // pred_check
          %p288 = pneg %p124
        $region22: #{tpu_custom_call.1} parent=11 // pred_check_branch
          %290 = sbr.rel (%p288) target = $region24
        $region23: #{tpu_custom_call.1} parent=11 // pred_region
          %s292 = ssub.s32 512, 512
          %293 = vsyncadd [#allocation6], %s292
          %s294 = sshll.u32 [#allocation7], 4
          %s295 = int_to_ptr.vmem [resolvable:$true] %s294
          %300 = dma.hbm_to_vmem [thread:$0]  %s3, 512, %s295, [#allocation6], 128, 128, 8
        $region24: #{tpu_custom_call.1} parent=11 // pred_fallthru
          _
        // Predicated region
        $region25: #{tpu_custom_call.1} parent=11 // pred_check
          %p301 = pneg %p145
        $region26: #{tpu_custom_call.1} parent=11 // pred_check_branch
          %303 = sbr.rel (%p301) target = $region28
        $region27: #{tpu_custom_call.1} parent=11 // pred_region
          _
        $region28: #{tpu_custom_call.1} parent=11 // pred_fallthru
          _
        // Predicated region
        $region29: #{tpu_custom_call.1} parent=11 // pred_check
          %p304 = pneg %p166
        $region30: #{tpu_custom_call.1} parent=11 // pred_check_branch
          %306 = sbr.rel (%p304) target = $region32
        $region31: #{tpu_custom_call.1} parent=11 // pred_region
          %s308 = ssub.s32 512, 512
          %309 = vsyncadd [#allocation9], %s308
          %s310 = sshll.u32 [#allocation8], 4
          %s311 = int_to_ptr.vmem [resolvable:$true] %s310
          %316 = dma.hbm_to_vmem [thread:$0]  %s5, 512, %s311, [#allocation9], 128, 128, 8
        $region32: #{tpu_custom_call.1} parent=11 // pred_fallthru
          _
        // Predicated region
        $region33: #{tpu_custom_call.1} parent=11 // pred_check
          %p317 = pneg %p187
        $region34: #{tpu_custom_call.1} parent=11 // pred_check_branch
          %319 = sbr.rel (%p317) target = $region36
        $region35: #{tpu_custom_call.1} parent=11 // pred_region
          _
        $region36: #{tpu_custom_call.1} parent=11 // pred_fallthru
          _
        // Predicated region
        $region37: #{tpu_custom_call.1} parent=11 // pred_check
          %p320 = pneg %p208
        $region38: #{tpu_custom_call.1} parent=11 // pred_check_branch
          %322 = sbr.rel (%p320) target = $region40
        $region39: #{tpu_custom_call.1} parent=11 // pred_region
          %s324 = ssub.s32 512, 512
          %325 = vsyncadd [#allocation9], %s324
          %s326 = sshll.u32 [#allocation10], 4
          %s327 = int_to_ptr.vmem [resolvable:$true] %s326
          %332 = dma.hbm_to_vmem [thread:$0]  %s7, 512, %s327, [#allocation9], 128, 128, 8
        $region40: #{tpu_custom_call.1} parent=11 // pred_fallthru
          _
        // Predicated region
        $region41: #{tpu_custom_call.1} parent=11 // pred_check
          %p333 = pneg %p229
        $region42: #{tpu_custom_call.1} parent=11 // pred_check_branch
          %335 = sbr.rel (%p333) target = $region44
        $region43: #{tpu_custom_call.1} parent=11 // pred_region
          _
        $region44: #{tpu_custom_call.1} parent=11 // pred_fallthru
          _
      $region12: #{tpu_custom_call.1} parent=5 // pred_fallthru
        _
      %p336 = scmp.lt.s32.totalorder %s23, 2
      // Predicated region
      $region45: #{tpu_custom_call.1} parent=5 // pred_check
        %p337 = pneg %p336
      $region46: #{tpu_custom_call.1} parent=5 // pred_check_branch
        %339 = sbr.rel (%p337) target = $region48
      $region47: #{tpu_custom_call.1} parent=5 // pred_region
        // Predicated region
        $region49: #{tpu_custom_call.1} parent=47 // pred_check
          %p340 = pneg %p55
        $region50: #{tpu_custom_call.1} parent=47 // pred_check_branch
          %342 = sbr.rel (%p340) target = $region52
        $region51: #{tpu_custom_call.1} parent=47 // pred_region
          %s343 = sand.u32 %s45, 1
          %s344 = scalar_lea.sflag [#allocation3], %s343
          %s345 = sand.u32 %s45, 1
          %s346 = smul.addr %s345, 8
          %s347 = scalar_lea.vmem [#allocation2], %s346
          %s349 = ssub.s32 128, 128
          %350 = vsyncadd %s344, %s349
          %s351 = smul.addr %s30, 128
          %s352 = scalar_lea.hbm %s0, %s351
          %s354 = sshll.u32 %s347, 4
          %s355 = int_to_ptr.vmem [resolvable:$true] %s354
          %357 = dma.hbm_to_vmem [thread:$0]  %s352, 128, %s355, %s344
        $region52: #{tpu_custom_call.1} parent=47 // pred_fallthru
          _
      $region48: #{tpu_custom_call.1} parent=5 // pred_fallthru
        _
      %p358 = scmp.le.s32.totalorder 1, %s23
      %p359 = scmp.lt.s32.totalorder %s23, 3
      %p360 = pnand %p358, %p359
      %p361 = pneg %p360
      // Predicated region
      $region53: #{tpu_custom_call.1} parent=5 // pred_check
        _
      $region54: #{tpu_custom_call.1} parent=5 // pred_check_branch
        %363 = sbr.rel (%p360) target = $region56
      $region55: #{tpu_custom_call.1} parent=5 // pred_region
        %s364 = ssub.s32 %s23, 1
        %s365 = sand.u32 %s48, 1
        %s366 = scalar_lea.sflag [#allocation3], %s365
        %s367 = sand.u32 %s48, 1
        %s368 = smul.addr %s367, 8
        %s369 = scalar_lea.vmem [#allocation2], %s368
        // Predicated region
        $region57: #{tpu_custom_call.1} parent=55 // pred_check
          %p370 = pneg %p61
        $region58: #{tpu_custom_call.1} parent=55 // pred_check_branch
          %372 = sbr.rel (%p370) target = $region60
        $region59: #{tpu_custom_call.1} parent=55 // pred_region
          %373 = dma.done %s366, 128
        $region60: #{tpu_custom_call.1} parent=55 // pred_fallthru
          _
        // Predicated region
        $region61: #{tpu_custom_call.1} parent=55 // pred_check
          %p374 = pneg %p82
        $region62: #{tpu_custom_call.1} parent=55 // pred_check_branch
          %376 = sbr.rel (%p374) target = $region64
        $region63: #{tpu_custom_call.1} parent=55 // pred_region
          %377 = dma.done [#allocation6], 512
        $region64: #{tpu_custom_call.1} parent=55 // pred_fallthru
          _
        // Predicated region
        $region65: #{tpu_custom_call.1} parent=55 // pred_check
          %p378 = pneg %p124
        $region66: #{tpu_custom_call.1} parent=55 // pred_check_branch
          %380 = sbr.rel (%p378) target = $region68
        $region67: #{tpu_custom_call.1} parent=55 // pred_region
          %381 = dma.done [#allocation6], 512
        $region68: #{tpu_custom_call.1} parent=55 // pred_fallthru
          _
        // Predicated region
        $region69: #{tpu_custom_call.1} parent=55 // pred_check
          %p382 = pneg %p166
        $region70: #{tpu_custom_call.1} parent=55 // pred_check_branch
          %384 = sbr.rel (%p382) target = $region72
        $region71: #{tpu_custom_call.1} parent=55 // pred_region
          %385 = dma.done [#allocation9], 512
        $region72: #{tpu_custom_call.1} parent=55 // pred_fallthru
          _
        // Predicated region
        $region73: #{tpu_custom_call.1} parent=55 // pred_check
          %p386 = pneg %p208
        $region74: #{tpu_custom_call.1} parent=55 // pred_check_branch
          %388 = sbr.rel (%p386) target = $region76
        $region75: #{tpu_custom_call.1} parent=55 // pred_region
          %389 = dma.done [#allocation9], 512
        $region76: #{tpu_custom_call.1} parent=55 // pred_fallthru
          _
        %s390 = sand.u32 %s48, 1
        %s391 = scalar_lea.sflag [#allocation3], %s390
        %s392 = sand.u32 %s48, 1
        %s393 = smul.addr %s392, 8
        %s394 = scalar_lea.vmem [#allocation2], %s393
        %p395 = pneg %p61
        %p396 = pneg %p58
        %p397 = pneg %p82
        %p398 = pneg %p79
        %p399 = pneg %p103
        %p400 = pneg %p100
        %p401 = pneg %p124
        %p402 = pneg %p121
        %p403 = pneg %p145
        %p404 = pneg %p142
        %p405 = pneg %p166
        %p406 = pneg %p163
        %p407 = pneg %p187
        %p408 = pneg %p184
        %p409 = pneg %p208
        %p410 = pneg %p205
        %p411 = pneg %p229
        %p412 = pneg %p226
        %p413 = pneg %p257
        %p414 = pneg %p254
        %s415 = sand.u32 %s244, 1
        %s416 = scalar_lea.sflag [#allocation4], %s415
        %s417 = sand.u32 %s244, 1
        %s418 = smul.addr %s417, 8
        %s419 = scalar_lea.vmem [#allocation11], %s418
        %v420 = vld [vmem:[%s369] sm:$0xff]
        %s421 = smul.u32 %s33, 8
        %s422 = scalar_lea.vmem %s369, %s421 [#allocation2]
        %v423 = vld [vmem:[%s422] sm:$0xff]
        %v424 = vld [vmem:[#allocation5] sm:$0xff]
        %v425 = vld [vmem:[#allocation5 + $0x8] sm:$0xff]
        %v426 = vld [vmem:[#allocation5 + $0x10] sm:$0xff]
        %v427 = vld [vmem:[#allocation5 + $0x18] sm:$0xff]
        %v428 = vld [vmem:[%s2] sm:$0x1]
        %v430 = vlaneseq
        %v431 = vshrl.u32 %v430, 7
        %v432 = vsub.s32 0, %v431
        %v433 = vrot.slane %v428, %v432
        %vm435 = vcmask 261120
        %v437 = vsel %vm435, %v423, 0
        %439 = vmatprep.subr.mxu0 0.0
        %440 = vmatpush1.msra.mxu0 0.0
        %441 = vmatprep.subr.mxu0 0.0
        %442 = vmatpush1.msra.mxu0 0.0
        %443 = vmatprep.subr.mxu0 0.0
        %444 = vmatpush1.msra.mxu0 0.0
        %445 = vmatprep.subr.mxu0 0.0
        %446 = vmatpush1.msra.mxu0 0.0
        %447 = vmatprep.subr.mxu0 0.0
        %448 = vmatpush1.msra.mxu0 0.0
        %449 = vmatprep.subr.mxu0 0.0
        %450 = vmatpush1.msra.mxu0 0.0
        %451 = vmatprep.subr.mxu0 0.0
        %452 = vmatpush1.msra.mxu0 0.0
        %453 = vmatprep.subr.mxu0 0.0
        %454 = vmatpush1.msra.mxu0 0.0
        %455 = vmatprep.subr.mxu0 0.0
        %456 = vmatpush1.msra.mxu0 0.0
        %457 = vmatprep.subr.mxu0 0.0
        %458 = vmatpush1.msra.mxu0 0.0
        %459 = vmatprep.subr.mxu0 0.0
        %460 = vmatpush1.msra.mxu0 0.0
        %461 = vmatprep.subr.mxu0 0.0
        %462 = vmatpush1.msra.mxu0 0.0
        %463 = vmatprep.subr.mxu0 0.0
        %464 = vmatpush1.msra.mxu0 %v427
        %465 = vmatprep.subr.mxu0 0.0
        %466 = vmatpush1.msra.mxu0 %v426
        %467 = vmatprep.subr.mxu0 0.0
        %468 = vmatpush1.msra.mxu0 %v425
        %469 = vmatprep.subr.mxu0 0.0
        %470 = vmatpush1.msra.mxu0 %v424
        %471 = vmatprep.subr.mxu0 0.0
        %472 = vmatpush2.msra.mxu0 0.0
        %473 = vmatprep.subr.mxu0 0.0
        %474 = vmatpush2.msra.mxu0 0.0
        %475 = vmatprep.subr.mxu0 0.0
        %476 = vmatpush2.msra.mxu0 0.0
        %477 = vmatprep.subr.mxu0 0.0
        %478 = vmatpush2.msra.mxu0 0.0
        %479 = vmatprep.subr.mxu0 0.0
        %480 = vmatpush2.msra.mxu0 0.0
        %481 = vmatprep.subr.mxu0 0.0
        %482 = vmatpush2.msra.mxu0 0.0
        %483 = vmatprep.subr.mxu0 0.0
        %484 = vmatpush2.msra.mxu0 0.0
        %485 = vmatprep.subr.mxu0 0.0
        %486 = vmatpush2.msra.mxu0 0.0
        %487 = vmatprep.subr.mxu0 0.0
        %488 = vmatpush2.msra.mxu0 0.0
        %489 = vmatprep.subr.mxu0 0.0
        %490 = vmatpush2.msra.mxu0 0.0
        %491 = vmatprep.subr.mxu0 0.0
        %492 = vmatpush2.msra.mxu0 0.0
        %493 = vmatprep.subr.mxu0 0.0
        %494 = vmatpush2.msra.mxu0 0.0
        %495 = vmatprep.subr.mxu0 0.0
        %496 = vmatpush2.msra.mxu0 0.0
        %497 = vmatprep.subr.mxu0 0.0
        %498 = vmatpush2.msra.mxu0 0.0
        %499 = vmatprep.subr.mxu0 0.0
        %500 = vmatpush2.msra.mxu0 0.0
        %501 = vmatprep.subr.mxu0 0.0
        %502 = vmatpush2.msra.mxu0 0.0
        %503 = vmatprep.mubr.f32.mxu0 0.0
        %504 = vmatmul.mubr.f32.gmra.mxu0 %v437
        %v505 = vpop.f32.mrf.mxu0
        %v506 = vadd.f32 %v433, %v505
        %v507 = vpop.f32.mrf.mxu0
        %508 = vdwg.mxu0
        %v509 = vld [vmem:[#allocation7] sm:$0xff]
        %v510 = vld [vmem:[#allocation7 + $0x8] sm:$0xff]
        %v511 = vld [vmem:[#allocation7 + $0x10] sm:$0xff]
        %v512 = vld [vmem:[#allocation7 + $0x18] sm:$0xff]
        %v513 = vld [vmem:[%s4] sm:$0x1]
        %v515 = vlaneseq
        %v516 = vshrl.u32 %v515, 7
        %v517 = vsub.s32 0, %v516
        %v518 = vrot.slane %v513, %v517
        %v521 = vsel %vm435, %v420, 0
        %523 = vmatprep.subr.mxu0 0.0
        %524 = vmatpush1.msra.mxu0 0.0
        %525 = vmatprep.subr.mxu0 0.0
        %526 = vmatpush1.msra.mxu0 0.0
        %527 = vmatprep.subr.mxu0 0.0
        %528 = vmatpush1.msra.mxu0 0.0
        %529 = vmatprep.subr.mxu0 0.0
        %530 = vmatpush1.msra.mxu0 0.0
        %531 = vmatprep.subr.mxu0 0.0
        %532 = vmatpush1.msra.mxu0 0.0
        %533 = vmatprep.subr.mxu0 0.0
        %534 = vmatpush1.msra.mxu0 0.0
        %535 = vmatprep.subr.mxu0 0.0
        %536 = vmatpush1.msra.mxu0 0.0
        %537 = vmatprep.subr.mxu0 0.0
        %538 = vmatpush1.msra.mxu0 0.0
        %539 = vmatprep.subr.mxu0 0.0
        %540 = vmatpush1.msra.mxu0 0.0
        %541 = vmatprep.subr.mxu0 0.0
        %542 = vmatpush1.msra.mxu0 0.0
        %543 = vmatprep.subr.mxu0 0.0
        %544 = vmatpush1.msra.mxu0 0.0
        %545 = vmatprep.subr.mxu0 0.0
        %546 = vmatpush1.msra.mxu0 0.0
        %547 = vmatprep.subr.mxu0 0.0
        %548 = vmatpush1.msra.mxu0 %v512
        %549 = vmatprep.subr.mxu0 0.0
        %550 = vmatpush1.msra.mxu0 %v511
        %551 = vmatprep.subr.mxu0 0.0
        %552 = vmatpush1.msra.mxu0 %v510
        %553 = vmatprep.subr.mxu0 0.0
        %554 = vmatpush1.msra.mxu0 %v509
        %555 = vmatprep.subr.mxu0 0.0
        %556 = vmatpush2.msra.mxu0 0.0
        %557 = vmatprep.subr.mxu0 0.0
        %558 = vmatpush2.msra.mxu0 0.0
        %559 = vmatprep.subr.mxu0 0.0
        %560 = vmatpush2.msra.mxu0 0.0
        %561 = vmatprep.subr.mxu0 0.0
        %562 = vmatpush2.msra.mxu0 0.0
        %563 = vmatprep.subr.mxu0 0.0
        %564 = vmatpush2.msra.mxu0 0.0
        %565 = vmatprep.subr.mxu0 0.0
        %566 = vmatpush2.msra.mxu0 0.0
        %567 = vmatprep.subr.mxu0 0.0
        %568 = vmatpush2.msra.mxu0 0.0
        %569 = vmatprep.subr.mxu0 0.0
        %570 = vmatpush2.msra.mxu0 0.0
        %571 = vmatprep.subr.mxu0 0.0
        %572 = vmatpush2.msra.mxu0 0.0
        %573 = vmatprep.subr.mxu0 0.0
        %574 = vmatpush2.msra.mxu0 0.0
        %575 = vmatprep.subr.mxu0 0.0
        %576 = vmatpush2.msra.mxu0 0.0
        %577 = vmatprep.subr.mxu0 0.0
        %578 = vmatpush2.msra.mxu0 0.0
        %579 = vmatprep.subr.mxu0 0.0
        %580 = vmatpush2.msra.mxu0 0.0
        %581 = vmatprep.subr.mxu0 0.0
        %582 = vmatpush2.msra.mxu0 0.0
        %583 = vmatprep.subr.mxu0 0.0
        %584 = vmatpush2.msra.mxu0 0.0
        %585 = vmatprep.subr.mxu0 0.0
        %586 = vmatpush2.msra.mxu0 0.0
        %587 = vmatprep.mubr.f32.mxu0 0.0
        %588 = vmatmul.mubr.f32.gmra.mxu0 %v521
        %v589 = vpop.f32.mrf.mxu0
        %v590 = vadd.f32 %v518, %v589
        %v591 = vpop.f32.mrf.mxu0
        %592 = vdwg.mxu0
        %v593 = vld [vmem:[#allocation8] sm:$0xff]
        %v594 = vld [vmem:[#allocation8 + $0x8] sm:$0xff]
        %v595 = vld [vmem:[#allocation8 + $0x10] sm:$0xff]
        %v596 = vld [vmem:[#allocation8 + $0x18] sm:$0xff]
        %v597 = vld [vmem:[%s6] sm:$0x1]
        %v599 = vlaneseq
        %v600 = vshrl.u32 %v599, 7
        %v601 = vsub.s32 0, %v600
        %v602 = vrot.slane %v597, %v601
        %604 = vmatprep.subr.mxu0 0.0
        %605 = vmatpush1.msra.mxu0 0.0
        %606 = vmatprep.subr.mxu0 0.0
        %607 = vmatpush1.msra.mxu0 0.0
        %608 = vmatprep.subr.mxu0 0.0
        %609 = vmatpush1.msra.mxu0 0.0
        %610 = vmatprep.subr.mxu0 0.0
        %611 = vmatpush1.msra.mxu0 0.0
        %612 = vmatprep.subr.mxu0 0.0
        %613 = vmatpush1.msra.mxu0 0.0
        %614 = vmatprep.subr.mxu0 0.0
        %615 = vmatpush1.msra.mxu0 0.0
        %616 = vmatprep.subr.mxu0 0.0
        %617 = vmatpush1.msra.mxu0 0.0
        %618 = vmatprep.subr.mxu0 0.0
        %619 = vmatpush1.msra.mxu0 0.0
        %620 = vmatprep.subr.mxu0 0.0
        %621 = vmatpush1.msra.mxu0 0.0
        %622 = vmatprep.subr.mxu0 0.0
        %623 = vmatpush1.msra.mxu0 0.0
        %624 = vmatprep.subr.mxu0 0.0
        %625 = vmatpush1.msra.mxu0 0.0
        %626 = vmatprep.subr.mxu0 0.0
        %627 = vmatpush1.msra.mxu0 0.0
        %628 = vmatprep.subr.mxu0 0.0
        %629 = vmatpush1.msra.mxu0 %v596
        %630 = vmatprep.subr.mxu0 0.0
        %631 = vmatpush1.msra.mxu0 %v595
        %632 = vmatprep.subr.mxu0 0.0
        %633 = vmatpush1.msra.mxu0 %v594
        %634 = vmatprep.subr.mxu0 0.0
        %635 = vmatpush1.msra.mxu0 %v593
        %636 = vmatprep.subr.mxu0 0.0
        %637 = vmatpush2.msra.mxu0 0.0
        %638 = vmatprep.subr.mxu0 0.0
        %639 = vmatpush2.msra.mxu0 0.0
        %640 = vmatprep.subr.mxu0 0.0
        %641 = vmatpush2.msra.mxu0 0.0
        %642 = vmatprep.subr.mxu0 0.0
        %643 = vmatpush2.msra.mxu0 0.0
        %644 = vmatprep.subr.mxu0 0.0
        %645 = vmatpush2.msra.mxu0 0.0
        %646 = vmatprep.subr.mxu0 0.0
        %647 = vmatpush2.msra.mxu0 0.0
        %648 = vmatprep.subr.mxu0 0.0
        %649 = vmatpush2.msra.mxu0 0.0
        %650 = vmatprep.subr.mxu0 0.0
        %651 = vmatpush2.msra.mxu0 0.0
        %652 = vmatprep.subr.mxu0 0.0
        %653 = vmatpush2.msra.mxu0 0.0
        %654 = vmatprep.subr.mxu0 0.0
        %655 = vmatpush2.msra.mxu0 0.0
        %656 = vmatprep.subr.mxu0 0.0
        %657 = vmatpush2.msra.mxu0 0.0
        %658 = vmatprep.subr.mxu0 0.0
        %659 = vmatpush2.msra.mxu0 0.0
        %660 = vmatprep.subr.mxu0 0.0
        %661 = vmatpush2.msra.mxu0 0.0
        %662 = vmatprep.subr.mxu0 0.0
        %663 = vmatpush2.msra.mxu0 0.0
        %664 = vmatprep.subr.mxu0 0.0
        %665 = vmatpush2.msra.mxu0 0.0
        %666 = vmatprep.subr.mxu0 0.0
        %667 = vmatpush2.msra.mxu0 0.0
        %668 = vmatprep.mubr.f32.mxu0 0.0
        %669 = vmatmul.mubr.f32.gmra.mxu0 %v521
        %v670 = vpop.f32.mrf.mxu0
        %v671 = vadd.f32 %v602, %v670
        %v672 = vpop.f32.mrf.mxu0
        %673 = vdwg.mxu0
        %vm674 = vcmask 64512
        %v676 = vsel %vm674, %v506, 0
        %v679 = vsel %vm674, %v590, 0
        %681 = vmatprep.subr.mxu0 0.0
        %682 = vmatpush1.xpose.msra.mxu0 0.0
        %683 = vmatprep.subr.mxu0 0.0
        %684 = vmatpush1.xpose.msra.mxu0 0.0
        %685 = vmatprep.subr.mxu0 0.0
        %686 = vmatpush1.xpose.msra.mxu0 0.0
        %687 = vmatprep.subr.mxu0 0.0
        %688 = vmatpush1.xpose.msra.mxu0 0.0
        %689 = vmatprep.subr.mxu0 0.0
        %690 = vmatpush1.xpose.msra.mxu0 0.0
        %691 = vmatprep.subr.mxu0 0.0
        %692 = vmatpush1.xpose.msra.mxu0 0.0
        %693 = vmatprep.subr.mxu0 0.0
        %694 = vmatpush1.xpose.msra.mxu0 0.0
        %695 = vmatprep.subr.mxu0 0.0
        %696 = vmatpush1.xpose.msra.mxu0 0.0
        %697 = vmatprep.subr.mxu0 0.0
        %698 = vmatpush1.xpose.msra.mxu0 0.0
        %699 = vmatprep.subr.mxu0 0.0
        %700 = vmatpush1.xpose.msra.mxu0 0.0
        %701 = vmatprep.subr.mxu0 0.0
        %702 = vmatpush1.xpose.msra.mxu0 0.0
        %703 = vmatprep.subr.mxu0 0.0
        %704 = vmatpush1.xpose.msra.mxu0 0.0
        %705 = vmatprep.subr.mxu0 0.0
        %706 = vmatpush1.xpose.msra.mxu0 0.0
        %707 = vmatprep.subr.mxu0 0.0
        %708 = vmatpush1.xpose.msra.mxu0 0.0
        %709 = vmatprep.subr.mxu0 0.0
        %710 = vmatpush1.xpose.msra.mxu0 0.0
        %711 = vmatprep.subr.mxu0 0.0
        %712 = vmatpush1.xpose.msra.mxu0 %v679
        %713 = vmatprep.subr.mxu0 0.0
        %714 = vmatpush2.xpose.msra.mxu0 0.0
        %715 = vmatprep.subr.mxu0 0.0
        %716 = vmatpush2.xpose.msra.mxu0 0.0
        %717 = vmatprep.subr.mxu0 0.0
        %718 = vmatpush2.xpose.msra.mxu0 0.0
        %719 = vmatprep.subr.mxu0 0.0
        %720 = vmatpush2.xpose.msra.mxu0 0.0
        %721 = vmatprep.subr.mxu0 0.0
        %722 = vmatpush2.xpose.msra.mxu0 0.0
        %723 = vmatprep.subr.mxu0 0.0
        %724 = vmatpush2.xpose.msra.mxu0 0.0
        %725 = vmatprep.subr.mxu0 0.0
        %726 = vmatpush2.xpose.msra.mxu0 0.0
        %727 = vmatprep.subr.mxu0 0.0
        %728 = vmatpush2.xpose.msra.mxu0 0.0
        %729 = vmatprep.subr.mxu0 0.0
        %730 = vmatpush2.xpose.msra.mxu0 0.0
        %731 = vmatprep.subr.mxu0 0.0
        %732 = vmatpush2.xpose.msra.mxu0 0.0
        %733 = vmatprep.subr.mxu0 0.0
        %734 = vmatpush2.xpose.msra.mxu0 0.0
        %735 = vmatprep.subr.mxu0 0.0
        %736 = vmatpush2.xpose.msra.mxu0 0.0
        %737 = vmatprep.subr.mxu0 0.0
        %738 = vmatpush2.xpose.msra.mxu0 0.0
        %739 = vmatprep.subr.mxu0 0.0
        %740 = vmatpush2.xpose.msra.mxu0 0.0
        %741 = vmatprep.subr.mxu0 0.0
        %742 = vmatpush2.xpose.msra.mxu0 0.0
        %743 = vmatprep.subr.mxu0 0.0
        %744 = vmatpush2.xpose.msra.mxu0 0.0
        %745 = vmatprep.mubr.f32.mxu0 0.0
        %746 = vmatmul.mubr.f32.gmra.mxu0 %v676
        %v747 = vpop.f32.mrf.mxu0
        %v748 = vadd.f32 0.0, %v747
        %v749 = vpop.f32.mrf.mxu0
        %750 = vdwg.mxu0
        %v751 = vmul.f32 %v748, 0.17677669
        %v752 = vsel %vm674, %v751, -inf
        %753 = vmax.xlane.f32.xlu0 %v752
        %v754 = vpop.xlane.xlu0 %753
        %v755 = vsub.f32 %v751, %v754
        %v756 = vmul.f32 %v755, 1.442695
        %v757 = vpow.pop %v756
        %v758 = vsel %vm674, %v757, 0.0
        %759 = vadd.xlane.f32.xlu0 %v758
        %v760 = vpop.xlane.xlu0 %759
        %v761 = vrcp.pop %v760
        %v762 = vmul.f32 %v757, %v761
        %v764 = vsel %vm674, %v762, 0
        %766 = vmatprep.subr.mxu0 0.0
        %767 = vmatpush1.msra.mxu0 0.0
        %768 = vmatprep.subr.mxu0 0.0
        %769 = vmatpush1.msra.mxu0 0.0
        %770 = vmatprep.subr.mxu0 0.0
        %771 = vmatpush1.msra.mxu0 0.0
        %772 = vmatprep.subr.mxu0 0.0
        %773 = vmatpush1.msra.mxu0 0.0
        %774 = vmatprep.subr.mxu0 0.0
        %775 = vmatpush1.msra.mxu0 0.0
        %776 = vmatprep.subr.mxu0 0.0
        %777 = vmatpush1.msra.mxu0 0.0
        %778 = vmatprep.subr.mxu0 0.0
        %779 = vmatpush1.msra.mxu0 0.0
        %780 = vmatprep.subr.mxu0 0.0
        %781 = vmatpush1.msra.mxu0 0.0
        %782 = vmatprep.subr.mxu0 0.0
        %783 = vmatpush1.msra.mxu0 0.0
        %784 = vmatprep.subr.mxu0 0.0
        %785 = vmatpush1.msra.mxu0 0.0
        %786 = vmatprep.subr.mxu0 0.0
        %787 = vmatpush1.msra.mxu0 0.0
        %788 = vmatprep.subr.mxu0 0.0
        %789 = vmatpush1.msra.mxu0 0.0
        %790 = vmatprep.subr.mxu0 0.0
        %791 = vmatpush1.msra.mxu0 0.0
        %792 = vmatprep.subr.mxu0 0.0
        %793 = vmatpush1.msra.mxu0 0.0
        %794 = vmatprep.subr.mxu0 0.0
        %795 = vmatpush1.msra.mxu0 0.0
        %796 = vmatprep.subr.mxu0 0.0
        %797 = vmatpush1.msra.mxu0 %v671
        %798 = vmatprep.subr.mxu0 0.0
        %799 = vmatpush2.msra.mxu0 0.0
        %800 = vmatprep.subr.mxu0 0.0
        %801 = vmatpush2.msra.mxu0 0.0
        %802 = vmatprep.subr.mxu0 0.0
        %803 = vmatpush2.msra.mxu0 0.0
        %804 = vmatprep.subr.mxu0 0.0
        %805 = vmatpush2.msra.mxu0 0.0
        %806 = vmatprep.subr.mxu0 0.0
        %807 = vmatpush2.msra.mxu0 0.0
        %808 = vmatprep.subr.mxu0 0.0
        %809 = vmatpush2.msra.mxu0 0.0
        %810 = vmatprep.subr.mxu0 0.0
        %811 = vmatpush2.msra.mxu0 0.0
        %812 = vmatprep.subr.mxu0 0.0
        %813 = vmatpush2.msra.mxu0 0.0
        %814 = vmatprep.subr.mxu0 0.0
        %815 = vmatpush2.msra.mxu0 0.0
        %816 = vmatprep.subr.mxu0 0.0
        %817 = vmatpush2.msra.mxu0 0.0
        %818 = vmatprep.subr.mxu0 0.0
        %819 = vmatpush2.msra.mxu0 0.0
        %820 = vmatprep.subr.mxu0 0.0
        %821 = vmatpush2.msra.mxu0 0.0
        %822 = vmatprep.subr.mxu0 0.0
        %823 = vmatpush2.msra.mxu0 0.0
        %824 = vmatprep.subr.mxu0 0.0
        %825 = vmatpush2.msra.mxu0 0.0
        %826 = vmatprep.subr.mxu0 0.0
        %827 = vmatpush2.msra.mxu0 0.0
        %828 = vmatprep.subr.mxu0 0.0
        %829 = vmatpush2.msra.mxu0 0.0
        %830 = vmatprep.mubr.f32.mxu0 0.0
        %831 = vmatmul.mubr.f32.gmra.mxu0 %v764
        %v832 = vpop.f32.mrf.mxu0
        %v833 = vadd.f32 0.0, %v832
        %v834 = vpop.f32.mrf.mxu0
        %835 = vdwg.mxu0
        %v836 = vld [vmem:[#allocation10] sm:$0xff]
        %837 = vrot.lane.b32.xlu0 %v506, 120
        %v838 = vpop.permute.xlu0 %837
        %839 = vrot.lane.b32.xlu0 %v590, 120
        %v840 = vpop.permute.xlu0 %839
        %v841 = vsel %vm674, %v838, 0
        %v843 = vsel %vm674, %v840, 0
        %845 = vmatprep.subr.mxu0 0.0
        %846 = vmatpush1.xpose.msra.mxu0 0.0
        %847 = vmatprep.subr.mxu0 0.0
        %848 = vmatpush1.xpose.msra.mxu0 0.0
        %849 = vmatprep.subr.mxu0 0.0
        %850 = vmatpush1.xpose.msra.mxu0 0.0
        %851 = vmatprep.subr.mxu0 0.0
        %852 = vmatpush1.xpose.msra.mxu0 0.0
        %853 = vmatprep.subr.mxu0 0.0
        %854 = vmatpush1.xpose.msra.mxu0 0.0
        %855 = vmatprep.subr.mxu0 0.0
        %856 = vmatpush1.xpose.msra.mxu0 0.0
        %857 = vmatprep.subr.mxu0 0.0
        %858 = vmatpush1.xpose.msra.mxu0 0.0
        %859 = vmatprep.subr.mxu0 0.0
        %860 = vmatpush1.xpose.msra.mxu0 0.0
        %861 = vmatprep.subr.mxu0 0.0
        %862 = vmatpush1.xpose.msra.mxu0 0.0
        %863 = vmatprep.subr.mxu0 0.0
        %864 = vmatpush1.xpose.msra.mxu0 0.0
        %865 = vmatprep.subr.mxu0 0.0
        %866 = vmatpush1.xpose.msra.mxu0 0.0
        %867 = vmatprep.subr.mxu0 0.0
        %868 = vmatpush1.xpose.msra.mxu0 0.0
        %869 = vmatprep.subr.mxu0 0.0
        %870 = vmatpush1.xpose.msra.mxu0 0.0
        %871 = vmatprep.subr.mxu0 0.0
        %872 = vmatpush1.xpose.msra.mxu0 0.0
        %873 = vmatprep.subr.mxu0 0.0
        %874 = vmatpush1.xpose.msra.mxu0 0.0
        %875 = vmatprep.subr.mxu0 0.0
        %876 = vmatpush1.xpose.msra.mxu0 %v843
        %877 = vmatprep.subr.mxu0 0.0
        %878 = vmatpush2.xpose.msra.mxu0 0.0
        %879 = vmatprep.subr.mxu0 0.0
        %880 = vmatpush2.xpose.msra.mxu0 0.0
        %881 = vmatprep.subr.mxu0 0.0
        %882 = vmatpush2.xpose.msra.mxu0 0.0
        %883 = vmatprep.subr.mxu0 0.0
        %884 = vmatpush2.xpose.msra.mxu0 0.0
        %885 = vmatprep.subr.mxu0 0.0
        %886 = vmatpush2.xpose.msra.mxu0 0.0
        %887 = vmatprep.subr.mxu0 0.0
        %888 = vmatpush2.xpose.msra.mxu0 0.0
        %889 = vmatprep.subr.mxu0 0.0
        %890 = vmatpush2.xpose.msra.mxu0 0.0
        %891 = vmatprep.subr.mxu0 0.0
        %892 = vmatpush2.xpose.msra.mxu0 0.0
        %893 = vmatprep.subr.mxu0 0.0
        %894 = vmatpush2.xpose.msra.mxu0 0.0
        %895 = vmatprep.subr.mxu0 0.0
        %896 = vmatpush2.xpose.msra.mxu0 0.0
        %897 = vmatprep.subr.mxu0 0.0
        %898 = vmatpush2.xpose.msra.mxu0 0.0
        %899 = vmatprep.subr.mxu0 0.0
        %900 = vmatpush2.xpose.msra.mxu0 0.0
        %901 = vmatprep.subr.mxu0 0.0
        %902 = vmatpush2.xpose.msra.mxu0 0.0
        %903 = vmatprep.subr.mxu0 0.0
        %904 = vmatpush2.xpose.msra.mxu0 0.0
        %905 = vmatprep.subr.mxu0 0.0
        %906 = vmatpush2.xpose.msra.mxu0 0.0
        %907 = vmatprep.subr.mxu0 0.0
        %908 = vmatpush2.xpose.msra.mxu0 0.0
        %909 = vmatprep.mubr.f32.mxu0 0.0
        %910 = vmatmul.mubr.f32.gmra.mxu0 %v841
        %v911 = vpop.f32.mrf.mxu0
        %v912 = vadd.f32 0.0, %v911
        %v913 = vpop.f32.mrf.mxu0
        %914 = vdwg.mxu0
        %v915 = vmul.f32 %v912, 0.17677669
        %v916 = vsel %vm674, %v915, -inf
        %917 = vmax.xlane.f32.xlu0 %v916
        %v918 = vpop.xlane.xlu0 %917
        %v919 = vsub.f32 %v915, %v918
        %v920 = vmul.f32 %v919, 1.442695
        %v921 = vpow.pop %v920
        %v922 = vsel %vm674, %v921, 0.0
        %923 = vadd.xlane.f32.xlu0 %v922
        %v924 = vpop.xlane.xlu0 %923
        %v925 = vrcp.pop %v924
        %v926 = vmul.f32 %v921, %v925
        %928 = vrot.lane.b32.xlu0 %v671, 120
        %v929 = vpop.permute.xlu0 %928
        %v932 = vsel %vm674, %v926, 0
        %934 = vmatprep.subr.mxu0 0.0
        %935 = vmatpush1.msra.mxu0 0.0
        %936 = vmatprep.subr.mxu0 0.0
        %937 = vmatpush1.msra.mxu0 0.0
        %938 = vmatprep.subr.mxu0 0.0
        %939 = vmatpush1.msra.mxu0 0.0
        %940 = vmatprep.subr.mxu0 0.0
        %941 = vmatpush1.msra.mxu0 0.0
        %942 = vmatprep.subr.mxu0 0.0
        %943 = vmatpush1.msra.mxu0 0.0
        %944 = vmatprep.subr.mxu0 0.0
        %945 = vmatpush1.msra.mxu0 0.0
        %946 = vmatprep.subr.mxu0 0.0
        %947 = vmatpush1.msra.mxu0 0.0
        %948 = vmatprep.subr.mxu0 0.0
        %949 = vmatpush1.msra.mxu0 0.0
        %950 = vmatprep.subr.mxu0 0.0
        %951 = vmatpush1.msra.mxu0 0.0
        %952 = vmatprep.subr.mxu0 0.0
        %953 = vmatpush1.msra.mxu0 0.0
        %954 = vmatprep.subr.mxu0 0.0
        %955 = vmatpush1.msra.mxu0 0.0
        %956 = vmatprep.subr.mxu0 0.0
        %957 = vmatpush1.msra.mxu0 0.0
        %958 = vmatprep.subr.mxu0 0.0
        %959 = vmatpush1.msra.mxu0 0.0
        %960 = vmatprep.subr.mxu0 0.0
        %961 = vmatpush1.msra.mxu0 0.0
        %962 = vmatprep.subr.mxu0 0.0
        %963 = vmatpush1.msra.mxu0 0.0
        %964 = vmatprep.subr.mxu0 0.0
        %965 = vmatpush1.msra.mxu0 %v929
        %966 = vmatprep.subr.mxu0 0.0
        %967 = vmatpush2.msra.mxu0 0.0
        %968 = vmatprep.subr.mxu0 0.0
        %969 = vmatpush2.msra.mxu0 0.0
        %970 = vmatprep.subr.mxu0 0.0
        %971 = vmatpush2.msra.mxu0 0.0
        %972 = vmatprep.subr.mxu0 0.0
        %973 = vmatpush2.msra.mxu0 0.0
        %974 = vmatprep.subr.mxu0 0.0
        %975 = vmatpush2.msra.mxu0 0.0
        %976 = vmatprep.subr.mxu0 0.0
        %977 = vmatpush2.msra.mxu0 0.0
        %978 = vmatprep.subr.mxu0 0.0
        %979 = vmatpush2.msra.mxu0 0.0
        %980 = vmatprep.subr.mxu0 0.0
        %981 = vmatpush2.msra.mxu0 0.0
        %982 = vmatprep.subr.mxu0 0.0
        %983 = vmatpush2.msra.mxu0 0.0
        %984 = vmatprep.subr.mxu0 0.0
        %985 = vmatpush2.msra.mxu0 0.0
        %986 = vmatprep.subr.mxu0 0.0
        %987 = vmatpush2.msra.mxu0 0.0
        %988 = vmatprep.subr.mxu0 0.0
        %989 = vmatpush2.msra.mxu0 0.0
        %990 = vmatprep.subr.mxu0 0.0
        %991 = vmatpush2.msra.mxu0 0.0
        %992 = vmatprep.subr.mxu0 0.0
        %993 = vmatpush2.msra.mxu0 0.0
        %994 = vmatprep.subr.mxu0 0.0
        %995 = vmatpush2.msra.mxu0 0.0
        %996 = vmatprep.subr.mxu0 0.0
        %997 = vmatpush2.msra.mxu0 0.0
        %998 = vmatprep.mubr.f32.mxu0 0.0
        %999 = vmatmul.mubr.f32.gmra.mxu0 %v932
        %v1000 = vpop.f32.mrf.mxu0
        %v1001 = vadd.f32 0.0, %v1000
        %v1002 = vpop.f32.mrf.mxu0
        %1003 = vdwg.mxu0
        %v1004 = vld [vmem:[#allocation10 + $0x8] sm:$0xff]
        %v1006 = vsel %vm674, %v1001, 0
        %1008 = vmatprep.subr.mxu0 0.0
        %1009 = vmatpush1.msra.mxu0 0.0
        %1010 = vmatprep.subr.mxu0 0.0
        %1011 = vmatpush1.msra.mxu0 0.0
        %1012 = vmatprep.subr.mxu0 0.0
        %1013 = vmatpush1.msra.mxu0 0.0
        %1014 = vmatprep.subr.mxu0 0.0
        %1015 = vmatpush1.msra.mxu0 0.0
        %1016 = vmatprep.subr.mxu0 0.0
        %1017 = vmatpush1.msra.mxu0 0.0
        %1018 = vmatprep.subr.mxu0 0.0
        %1019 = vmatpush1.msra.mxu0 0.0
        %1020 = vmatprep.subr.mxu0 0.0
        %1021 = vmatpush1.msra.mxu0 0.0
        %1022 = vmatprep.subr.mxu0 0.0
        %1023 = vmatpush1.msra.mxu0 0.0
        %1024 = vmatprep.subr.mxu0 0.0
        %1025 = vmatpush1.msra.mxu0 0.0
        %1026 = vmatprep.subr.mxu0 0.0
        %1027 = vmatpush1.msra.mxu0 0.0
        %1028 = vmatprep.subr.mxu0 0.0
        %1029 = vmatpush1.msra.mxu0 0.0
        %1030 = vmatprep.subr.mxu0 0.0
        %1031 = vmatpush1.msra.mxu0 0.0
        %1032 = vmatprep.subr.mxu0 0.0
        %1033 = vmatpush1.msra.mxu0 0.0
        %1034 = vmatprep.subr.mxu0 0.0
        %1035 = vmatpush1.msra.mxu0 0.0
        %1036 = vmatprep.subr.mxu0 0.0
        %1037 = vmatpush1.msra.mxu0 0.0
        %1038 = vmatprep.subr.mxu0 0.0
        %1039 = vmatpush1.msra.mxu0 %v1004
        %1040 = vmatprep.subr.mxu0 0.0
        %1041 = vmatpush2.msra.mxu0 0.0
        %1042 = vmatprep.subr.mxu0 0.0
        %1043 = vmatpush2.msra.mxu0 0.0
        %1044 = vmatprep.subr.mxu0 0.0
        %1045 = vmatpush2.msra.mxu0 0.0
        %1046 = vmatprep.subr.mxu0 0.0
        %1047 = vmatpush2.msra.mxu0 0.0
        %1048 = vmatprep.subr.mxu0 0.0
        %1049 = vmatpush2.msra.mxu0 0.0
        %1050 = vmatprep.subr.mxu0 0.0
        %1051 = vmatpush2.msra.mxu0 0.0
        %1052 = vmatprep.subr.mxu0 0.0
        %1053 = vmatpush2.msra.mxu0 0.0
        %1054 = vmatprep.subr.mxu0 0.0
        %1055 = vmatpush2.msra.mxu0 0.0
        %1056 = vmatprep.subr.mxu0 0.0
        %1057 = vmatpush2.msra.mxu0 0.0
        %1058 = vmatprep.subr.mxu0 0.0
        %1059 = vmatpush2.msra.mxu0 0.0
        %1060 = vmatprep.subr.mxu0 0.0
        %1061 = vmatpush2.msra.mxu0 0.0
        %1062 = vmatprep.subr.mxu0 0.0
        %1063 = vmatpush2.msra.mxu0 0.0
        %1064 = vmatprep.subr.mxu0 0.0
        %1065 = vmatpush2.msra.mxu0 0.0
        %1066 = vmatprep.subr.mxu0 0.0
        %1067 = vmatpush2.msra.mxu0 0.0
        %1068 = vmatprep.subr.mxu0 0.0
        %1069 = vmatpush2.msra.mxu0 0.0
        %1070 = vmatprep.subr.mxu0 0.0
        %1071 = vmatpush2.msra.mxu0 0.0
        %1072 = vmatprep.mubr.f32.mxu0 0.0
        %1073 = vmatmul.mubr.f32.gmra.mxu0 %v1006
        %v1074 = vpop.f32.mrf.mxu0
        %v1075 = vadd.f32 0.0, %v1074
        %v1076 = vpop.f32.mrf.mxu0
        %1077 = vdwg.mxu0
        %v1079 = vsel %vm674, %v833, 0
        %1081 = vmatprep.subr.mxu0 0.0
        %1082 = vmatpush1.msra.mxu0 0.0
        %1083 = vmatprep.subr.mxu0 0.0
        %1084 = vmatpush1.msra.mxu0 0.0
        %1085 = vmatprep.subr.mxu0 0.0
        %1086 = vmatpush1.msra.mxu0 0.0
        %1087 = vmatprep.subr.mxu0 0.0
        %1088 = vmatpush1.msra.mxu0 0.0
        %1089 = vmatprep.subr.mxu0 0.0
        %1090 = vmatpush1.msra.mxu0 0.0
        %1091 = vmatprep.subr.mxu0 0.0
        %1092 = vmatpush1.msra.mxu0 0.0
        %1093 = vmatprep.subr.mxu0 0.0
        %1094 = vmatpush1.msra.mxu0 0.0
        %1095 = vmatprep.subr.mxu0 0.0
        %1096 = vmatpush1.msra.mxu0 0.0
        %1097 = vmatprep.subr.mxu0 0.0
        %1098 = vmatpush1.msra.mxu0 0.0
        %1099 = vmatprep.subr.mxu0 0.0
        %1100 = vmatpush1.msra.mxu0 0.0
        %1101 = vmatprep.subr.mxu0 0.0
        %1102 = vmatpush1.msra.mxu0 0.0
        %1103 = vmatprep.subr.mxu0 0.0
        %1104 = vmatpush1.msra.mxu0 0.0
        %1105 = vmatprep.subr.mxu0 0.0
        %1106 = vmatpush1.msra.mxu0 0.0
        %1107 = vmatprep.subr.mxu0 0.0
        %1108 = vmatpush1.msra.mxu0 0.0
        %1109 = vmatprep.subr.mxu0 0.0
        %1110 = vmatpush1.msra.mxu0 0.0
        %1111 = vmatprep.subr.mxu0 0.0
        %1112 = vmatpush1.msra.mxu0 %v836
        %1113 = vmatprep.subr.mxu0 0.0
        %1114 = vmatpush2.msra.mxu0 0.0
        %1115 = vmatprep.subr.mxu0 0.0
        %1116 = vmatpush2.msra.mxu0 0.0
        %1117 = vmatprep.subr.mxu0 0.0
        %1118 = vmatpush2.msra.mxu0 0.0
        %1119 = vmatprep.subr.mxu0 0.0
        %1120 = vmatpush2.msra.mxu0 0.0
        %1121 = vmatprep.subr.mxu0 0.0
        %1122 = vmatpush2.msra.mxu0 0.0
        %1123 = vmatprep.subr.mxu0 0.0
        %1124 = vmatpush2.msra.mxu0 0.0
        %1125 = vmatprep.subr.mxu0 0.0
        %1126 = vmatpush2.msra.mxu0 0.0
        %1127 = vmatprep.subr.mxu0 0.0
        %1128 = vmatpush2.msra.mxu0 0.0
        %1129 = vmatprep.subr.mxu0 0.0
        %1130 = vmatpush2.msra.mxu0 0.0
        %1131 = vmatprep.subr.mxu0 0.0
        %1132 = vmatpush2.msra.mxu0 0.0
        %1133 = vmatprep.subr.mxu0 0.0
        %1134 = vmatpush2.msra.mxu0 0.0
        %1135 = vmatprep.subr.mxu0 0.0
        %1136 = vmatpush2.msra.mxu0 0.0
        %1137 = vmatprep.subr.mxu0 0.0
        %1138 = vmatpush2.msra.mxu0 0.0
        %1139 = vmatprep.subr.mxu0 0.0
        %1140 = vmatpush2.msra.mxu0 0.0
        %1141 = vmatprep.subr.mxu0 0.0
        %1142 = vmatpush2.msra.mxu0 0.0
        %1143 = vmatprep.subr.mxu0 0.0
        %1144 = vmatpush2.msra.mxu0 0.0
        %1145 = vmatprep.mubr.f32.mxu0 0.0
        %1146 = vmatmul.mubr.f32.gmra.mxu0 %v1079
        %v1147 = vpop.f32.mrf.mxu0
        %v1148 = vadd.f32 %v1075, %v1147
        %v1149 = vpop.f32.mrf.mxu0
        %1150 = vdwg.mxu0
        %1151 = vrot.lane.b32.xlu0 %v506, 112
        %v1152 = vpop.permute.xlu0 %1151
        %1153 = vrot.lane.b32.xlu0 %v590, 112
        %v1154 = vpop.permute.xlu0 %1153
        %v1155 = vsel %vm674, %v1152, 0
        %v1157 = vsel %vm674, %v1154, 0
        %1159 = vmatprep.subr.mxu0 0.0
        %1160 = vmatpush1.xpose.msra.mxu0 0.0
        %1161 = vmatprep.subr.mxu0 0.0
        %1162 = vmatpush1.xpose.msra.mxu0 0.0
        %1163 = vmatprep.subr.mxu0 0.0
        %1164 = vmatpush1.xpose.msra.mxu0 0.0
        %1165 = vmatprep.subr.mxu0 0.0
        %1166 = vmatpush1.xpose.msra.mxu0 0.0
        %1167 = vmatprep.subr.mxu0 0.0
        %1168 = vmatpush1.xpose.msra.mxu0 0.0
        %1169 = vmatprep.subr.mxu0 0.0
        %1170 = vmatpush1.xpose.msra.mxu0 0.0
        %1171 = vmatprep.subr.mxu0 0.0
        %1172 = vmatpush1.xpose.msra.mxu0 0.0
        %1173 = vmatprep.subr.mxu0 0.0
        %1174 = vmatpush1.xpose.msra.mxu0 0.0
        %1175 = vmatprep.subr.mxu0 0.0
        %1176 = vmatpush1.xpose.msra.mxu0 0.0
        %1177 = vmatprep.subr.mxu0 0.0
        %1178 = vmatpush1.xpose.msra.mxu0 0.0
        %1179 = vmatprep.subr.mxu0 0.0
        %1180 = vmatpush1.xpose.msra.mxu0 0.0
        %1181 = vmatprep.subr.mxu0 0.0
        %1182 = vmatpush1.xpose.msra.mxu0 0.0
        %1183 = vmatprep.subr.mxu0 0.0
        %1184 = vmatpush1.xpose.msra.mxu0 0.0
        %1185 = vmatprep.subr.mxu0 0.0
        %1186 = vmatpush1.xpose.msra.mxu0 0.0
        %1187 = vmatprep.subr.mxu0 0.0
        %1188 = vmatpush1.xpose.msra.mxu0 0.0
        %1189 = vmatprep.subr.mxu0 0.0
        %1190 = vmatpush1.xpose.msra.mxu0 %v1157
        %1191 = vmatprep.subr.mxu0 0.0
        %1192 = vmatpush2.xpose.msra.mxu0 0.0
        %1193 = vmatprep.subr.mxu0 0.0
        %1194 = vmatpush2.xpose.msra.mxu0 0.0
        %1195 = vmatprep.subr.mxu0 0.0
        %1196 = vmatpush2.xpose.msra.mxu0 0.0
        %1197 = vmatprep.subr.mxu0 0.0
        %1198 = vmatpush2.xpose.msra.mxu0 0.0
        %1199 = vmatprep.subr.mxu0 0.0
        %1200 = vmatpush2.xpose.msra.mxu0 0.0
        %1201 = vmatprep.subr.mxu0 0.0
        %1202 = vmatpush2.xpose.msra.mxu0 0.0
        %1203 = vmatprep.subr.mxu0 0.0
        %1204 = vmatpush2.xpose.msra.mxu0 0.0
        %1205 = vmatprep.subr.mxu0 0.0
        %1206 = vmatpush2.xpose.msra.mxu0 0.0
        %1207 = vmatprep.subr.mxu0 0.0
        %1208 = vmatpush2.xpose.msra.mxu0 0.0
        %1209 = vmatprep.subr.mxu0 0.0
        %1210 = vmatpush2.xpose.msra.mxu0 0.0
        %1211 = vmatprep.subr.mxu0 0.0
        %1212 = vmatpush2.xpose.msra.mxu0 0.0
        %1213 = vmatprep.subr.mxu0 0.0
        %1214 = vmatpush2.xpose.msra.mxu0 0.0
        %1215 = vmatprep.subr.mxu0 0.0
        %1216 = vmatpush2.xpose.msra.mxu0 0.0
        %1217 = vmatprep.subr.mxu0 0.0
        %1218 = vmatpush2.xpose.msra.mxu0 0.0
        %1219 = vmatprep.subr.mxu0 0.0
        %1220 = vmatpush2.xpose.msra.mxu0 0.0
        %1221 = vmatprep.subr.mxu0 0.0
        %1222 = vmatpush2.xpose.msra.mxu0 0.0
        %1223 = vmatprep.mubr.f32.mxu0 0.0
        %1224 = vmatmul.mubr.f32.gmra.mxu0 %v1155
        %v1225 = vpop.f32.mrf.mxu0
        %v1226 = vadd.f32 0.0, %v1225
        %v1227 = vpop.f32.mrf.mxu0
        %1228 = vdwg.mxu0
        %v1229 = vmul.f32 %v1226, 0.17677669
        %v1230 = vsel %vm674, %v1229, -inf
        %1231 = vmax.xlane.f32.xlu0 %v1230
        %v1232 = vpop.xlane.xlu0 %1231
        %v1233 = vsub.f32 %v1229, %v1232
        %v1234 = vmul.f32 %v1233, 1.442695
        %v1235 = vpow.pop %v1234
        %v1236 = vsel %vm674, %v1235, 0.0
        %1237 = vadd.xlane.f32.xlu0 %v1236
        %v1238 = vpop.xlane.xlu0 %1237
        %v1239 = vrcp.pop %v1238
        %v1240 = vmul.f32 %v1235, %v1239
        %1241 = vrot.lane.b32.xlu0 %v671, 112
        %v1242 = vpop.permute.xlu0 %1241
        %v1245 = vsel %vm674, %v1240, 0
        %1247 = vmatprep.subr.mxu0 0.0
        %1248 = vmatpush1.msra.mxu0 0.0
        %1249 = vmatprep.subr.mxu0 0.0
        %1250 = vmatpush1.msra.mxu0 0.0
        %1251 = vmatprep.subr.mxu0 0.0
        %1252 = vmatpush1.msra.mxu0 0.0
        %1253 = vmatprep.subr.mxu0 0.0
        %1254 = vmatpush1.msra.mxu0 0.0
        %1255 = vmatprep.subr.mxu0 0.0
        %1256 = vmatpush1.msra.mxu0 0.0
        %1257 = vmatprep.subr.mxu0 0.0
        %1258 = vmatpush1.msra.mxu0 0.0
        %1259 = vmatprep.subr.mxu0 0.0
        %1260 = vmatpush1.msra.mxu0 0.0
        %1261 = vmatprep.subr.mxu0 0.0
        %1262 = vmatpush1.msra.mxu0 0.0
        %1263 = vmatprep.subr.mxu0 0.0
        %1264 = vmatpush1.msra.mxu0 0.0
        %1265 = vmatprep.subr.mxu0 0.0
        %1266 = vmatpush1.msra.mxu0 0.0
        %1267 = vmatprep.subr.mxu0 0.0
        %1268 = vmatpush1.msra.mxu0 0.0
        %1269 = vmatprep.subr.mxu0 0.0
        %1270 = vmatpush1.msra.mxu0 0.0
        %1271 = vmatprep.subr.mxu0 0.0
        %1272 = vmatpush1.msra.mxu0 0.0
        %1273 = vmatprep.subr.mxu0 0.0
        %1274 = vmatpush1.msra.mxu0 0.0
        %1275 = vmatprep.subr.mxu0 0.0
        %1276 = vmatpush1.msra.mxu0 0.0
        %1277 = vmatprep.subr.mxu0 0.0
        %1278 = vmatpush1.msra.mxu0 %v1242
        %1279 = vmatprep.subr.mxu0 0.0
        %1280 = vmatpush2.msra.mxu0 0.0
        %1281 = vmatprep.subr.mxu0 0.0
        %1282 = vmatpush2.msra.mxu0 0.0
        %1283 = vmatprep.subr.mxu0 0.0
        %1284 = vmatpush2.msra.mxu0 0.0
        %1285 = vmatprep.subr.mxu0 0.0
        %1286 = vmatpush2.msra.mxu0 0.0
        %1287 = vmatprep.subr.mxu0 0.0
        %1288 = vmatpush2.msra.mxu0 0.0
        %1289 = vmatprep.subr.mxu0 0.0
        %1290 = vmatpush2.msra.mxu0 0.0
        %1291 = vmatprep.subr.mxu0 0.0
        %1292 = vmatpush2.msra.mxu0 0.0
        %1293 = vmatprep.subr.mxu0 0.0
        %1294 = vmatpush2.msra.mxu0 0.0
        %1295 = vmatprep.subr.mxu0 0.0
        %1296 = vmatpush2.msra.mxu0 0.0
        %1297 = vmatprep.subr.mxu0 0.0
        %1298 = vmatpush2.msra.mxu0 0.0
        %1299 = vmatprep.subr.mxu0 0.0
        %1300 = vmatpush2.msra.mxu0 0.0
        %1301 = vmatprep.subr.mxu0 0.0
        %1302 = vmatpush2.msra.mxu0 0.0
        %1303 = vmatprep.subr.mxu0 0.0
        %1304 = vmatpush2.msra.mxu0 0.0
        %1305 = vmatprep.subr.mxu0 0.0
        %1306 = vmatpush2.msra.mxu0 0.0
        %1307 = vmatprep.subr.mxu0 0.0
        %1308 = vmatpush2.msra.mxu0 0.0
        %1309 = vmatprep.subr.mxu0 0.0
        %1310 = vmatpush2.msra.mxu0 0.0
        %1311 = vmatprep.mubr.f32.mxu0 0.0
        %1312 = vmatmul.mubr.f32.gmra.mxu0 %v1245
        %v1313 = vpop.f32.mrf.mxu0
        %v1314 = vadd.f32 0.0, %v1313
        %v1315 = vpop.f32.mrf.mxu0
        %1316 = vdwg.mxu0
        %v1317 = vld [vmem:[#allocation10 + $0x10] sm:$0xff]
        %v1319 = vsel %vm674, %v1314, 0
        %1321 = vmatprep.subr.mxu0 0.0
        %1322 = vmatpush1.msra.mxu0 0.0
        %1323 = vmatprep.subr.mxu0 0.0
        %1324 = vmatpush1.msra.mxu0 0.0
        %1325 = vmatprep.subr.mxu0 0.0
        %1326 = vmatpush1.msra.mxu0 0.0
        %1327 = vmatprep.subr.mxu0 0.0
        %1328 = vmatpush1.msra.mxu0 0.0
        %1329 = vmatprep.subr.mxu0 0.0
        %1330 = vmatpush1.msra.mxu0 0.0
        %1331 = vmatprep.subr.mxu0 0.0
        %1332 = vmatpush1.msra.mxu0 0.0
        %1333 = vmatprep.subr.mxu0 0.0
        %1334 = vmatpush1.msra.mxu0 0.0
        %1335 = vmatprep.subr.mxu0 0.0
        %1336 = vmatpush1.msra.mxu0 0.0
        %1337 = vmatprep.subr.mxu0 0.0
        %1338 = vmatpush1.msra.mxu0 0.0
        %1339 = vmatprep.subr.mxu0 0.0
        %1340 = vmatpush1.msra.mxu0 0.0
        %1341 = vmatprep.subr.mxu0 0.0
        %1342 = vmatpush1.msra.mxu0 0.0
        %1343 = vmatprep.subr.mxu0 0.0
        %1344 = vmatpush1.msra.mxu0 0.0
        %1345 = vmatprep.subr.mxu0 0.0
        %1346 = vmatpush1.msra.mxu0 0.0
        %1347 = vmatprep.subr.mxu0 0.0
        %1348 = vmatpush1.msra.mxu0 0.0
        %1349 = vmatprep.subr.mxu0 0.0
        %1350 = vmatpush1.msra.mxu0 0.0
        %1351 = vmatprep.subr.mxu0 0.0
        %1352 = vmatpush1.msra.mxu0 %v1317
        %1353 = vmatprep.subr.mxu0 0.0
        %1354 = vmatpush2.msra.mxu0 0.0
        %1355 = vmatprep.subr.mxu0 0.0
        %1356 = vmatpush2.msra.mxu0 0.0
        %1357 = vmatprep.subr.mxu0 0.0
        %1358 = vmatpush2.msra.mxu0 0.0
        %1359 = vmatprep.subr.mxu0 0.0
        %1360 = vmatpush2.msra.mxu0 0.0
        %1361 = vmatprep.subr.mxu0 0.0
        %1362 = vmatpush2.msra.mxu0 0.0
        %1363 = vmatprep.subr.mxu0 0.0
        %1364 = vmatpush2.msra.mxu0 0.0
        %1365 = vmatprep.subr.mxu0 0.0
        %1366 = vmatpush2.msra.mxu0 0.0
        %1367 = vmatprep.subr.mxu0 0.0
        %1368 = vmatpush2.msra.mxu0 0.0
        %1369 = vmatprep.subr.mxu0 0.0
        %1370 = vmatpush2.msra.mxu0 0.0
        %1371 = vmatprep.subr.mxu0 0.0
        %1372 = vmatpush2.msra.mxu0 0.0
        %1373 = vmatprep.subr.mxu0 0.0
        %1374 = vmatpush2.msra.mxu0 0.0
        %1375 = vmatprep.subr.mxu0 0.0
        %1376 = vmatpush2.msra.mxu0 0.0
        %1377 = vmatprep.subr.mxu0 0.0
        %1378 = vmatpush2.msra.mxu0 0.0
        %1379 = vmatprep.subr.mxu0 0.0
        %1380 = vmatpush2.msra.mxu0 0.0
        %1381 = vmatprep.subr.mxu0 0.0
        %1382 = vmatpush2.msra.mxu0 0.0
        %1383 = vmatprep.subr.mxu0 0.0
        %1384 = vmatpush2.msra.mxu0 0.0
        %1385 = vmatprep.mubr.f32.mxu0 0.0
        %1386 = vmatmul.mubr.f32.gmra.mxu0 %v1319
        %v1387 = vpop.f32.mrf.mxu0
        %v1388 = vadd.f32 0.0, %v1387
        %v1389 = vpop.f32.mrf.mxu0
        %1390 = vdwg.mxu0
        %v1391 = vadd.f32 %v1148, %v1388
        %1392 = vrot.lane.b32.xlu0 %v506, 104
        %v1393 = vpop.permute.xlu0 %1392
        %1394 = vrot.lane.b32.xlu0 %v590, 104
        %v1395 = vpop.permute.xlu0 %1394
        %v1396 = vsel %vm674, %v1393, 0
        %v1398 = vsel %vm674, %v1395, 0
        %1400 = vmatprep.subr.mxu0 0.0
        %1401 = vmatpush1.xpose.msra.mxu0 0.0
        %1402 = vmatprep.subr.mxu0 0.0
        %1403 = vmatpush1.xpose.msra.mxu0 0.0
        %1404 = vmatprep.subr.mxu0 0.0
        %1405 = vmatpush1.xpose.msra.mxu0 0.0
        %1406 = vmatprep.subr.mxu0 0.0
        %1407 = vmatpush1.xpose.msra.mxu0 0.0
        %1408 = vmatprep.subr.mxu0 0.0
        %1409 = vmatpush1.xpose.msra.mxu0 0.0
        %1410 = vmatprep.subr.mxu0 0.0
        %1411 = vmatpush1.xpose.msra.mxu0 0.0
        %1412 = vmatprep.subr.mxu0 0.0
        %1413 = vmatpush1.xpose.msra.mxu0 0.0
        %1414 = vmatprep.subr.mxu0 0.0
        %1415 = vmatpush1.xpose.msra.mxu0 0.0
        %1416 = vmatprep.subr.mxu0 0.0
        %1417 = vmatpush1.xpose.msra.mxu0 0.0
        %1418 = vmatprep.subr.mxu0 0.0
        %1419 = vmatpush1.xpose.msra.mxu0 0.0
        %1420 = vmatprep.subr.mxu0 0.0
        %1421 = vmatpush1.xpose.msra.mxu0 0.0
        %1422 = vmatprep.subr.mxu0 0.0
        %1423 = vmatpush1.xpose.msra.mxu0 0.0
        %1424 = vmatprep.subr.mxu0 0.0
        %1425 = vmatpush1.xpose.msra.mxu0 0.0
        %1426 = vmatprep.subr.mxu0 0.0
        %1427 = vmatpush1.xpose.msra.mxu0 0.0
        %1428 = vmatprep.subr.mxu0 0.0
        %1429 = vmatpush1.xpose.msra.mxu0 0.0
        %1430 = vmatprep.subr.mxu0 0.0
        %1431 = vmatpush1.xpose.msra.mxu0 %v1398
        %1432 = vmatprep.subr.mxu0 0.0
        %1433 = vmatpush2.xpose.msra.mxu0 0.0
        %1434 = vmatprep.subr.mxu0 0.0
        %1435 = vmatpush2.xpose.msra.mxu0 0.0
        %1436 = vmatprep.subr.mxu0 0.0
        %1437 = vmatpush2.xpose.msra.mxu0 0.0
        %1438 = vmatprep.subr.mxu0 0.0
        %1439 = vmatpush2.xpose.msra.mxu0 0.0
        %1440 = vmatprep.subr.mxu0 0.0
        %1441 = vmatpush2.xpose.msra.mxu0 0.0
        %1442 = vmatprep.subr.mxu0 0.0
        %1443 = vmatpush2.xpose.msra.mxu0 0.0
        %1444 = vmatprep.subr.mxu0 0.0
        %1445 = vmatpush2.xpose.msra.mxu0 0.0
        %1446 = vmatprep.subr.mxu0 0.0
        %1447 = vmatpush2.xpose.msra.mxu0 0.0
        %1448 = vmatprep.subr.mxu0 0.0
        %1449 = vmatpush2.xpose.msra.mxu0 0.0
        %1450 = vmatprep.subr.mxu0 0.0
        %1451 = vmatpush2.xpose.msra.mxu0 0.0
        %1452 = vmatprep.subr.mxu0 0.0
        %1453 = vmatpush2.xpose.msra.mxu0 0.0
        %1454 = vmatprep.subr.mxu0 0.0
        %1455 = vmatpush2.xpose.msra.mxu0 0.0
        %1456 = vmatprep.subr.mxu0 0.0
        %1457 = vmatpush2.xpose.msra.mxu0 0.0
        %1458 = vmatprep.subr.mxu0 0.0
        %1459 = vmatpush2.xpose.msra.mxu0 0.0
        %1460 = vmatprep.subr.mxu0 0.0
        %1461 = vmatpush2.xpose.msra.mxu0 0.0
        %1462 = vmatprep.subr.mxu0 0.0
        %1463 = vmatpush2.xpose.msra.mxu0 0.0
        %1464 = vmatprep.mubr.f32.mxu0 0.0
        %1465 = vmatmul.mubr.f32.gmra.mxu0 %v1396
        %v1466 = vpop.f32.mrf.mxu0
        %v1467 = vadd.f32 0.0, %v1466
        %v1468 = vpop.f32.mrf.mxu0
        %1469 = vdwg.mxu0
        %v1470 = vmul.f32 %v1467, 0.17677669
        %v1471 = vsel %vm674, %v1470, -inf
        %1472 = vmax.xlane.f32.xlu0 %v1471
        %v1473 = vpop.xlane.xlu0 %1472
        %v1474 = vsub.f32 %v1470, %v1473
        %v1475 = vmul.f32 %v1474, 1.442695
        %v1476 = vpow.pop %v1475
        %v1477 = vsel %vm674, %v1476, 0.0
        %1478 = vadd.xlane.f32.xlu0 %v1477
        %v1479 = vpop.xlane.xlu0 %1478
        %v1480 = vrcp.pop %v1479
        %v1481 = vmul.f32 %v1476, %v1480
        %1482 = vrot.lane.b32.xlu0 %v671, 104
        %v1483 = vpop.permute.xlu0 %1482
        %v1486 = vsel %vm674, %v1481, 0
        %1488 = vmatprep.subr.mxu0 0.0
        %1489 = vmatpush1.msra.mxu0 0.0
        %1490 = vmatprep.subr.mxu0 0.0
        %1491 = vmatpush1.msra.mxu0 0.0
        %1492 = vmatprep.subr.mxu0 0.0
        %1493 = vmatpush1.msra.mxu0 0.0
        %1494 = vmatprep.subr.mxu0 0.0
        %1495 = vmatpush1.msra.mxu0 0.0
        %1496 = vmatprep.subr.mxu0 0.0
        %1497 = vmatpush1.msra.mxu0 0.0
        %1498 = vmatprep.subr.mxu0 0.0
        %1499 = vmatpush1.msra.mxu0 0.0
        %1500 = vmatprep.subr.mxu0 0.0
        %1501 = vmatpush1.msra.mxu0 0.0
        %1502 = vmatprep.subr.mxu0 0.0
        %1503 = vmatpush1.msra.mxu0 0.0
        %1504 = vmatprep.subr.mxu0 0.0
        %1505 = vmatpush1.msra.mxu0 0.0
        %1506 = vmatprep.subr.mxu0 0.0
        %1507 = vmatpush1.msra.mxu0 0.0
        %1508 = vmatprep.subr.mxu0 0.0
        %1509 = vmatpush1.msra.mxu0 0.0
        %1510 = vmatprep.subr.mxu0 0.0
        %1511 = vmatpush1.msra.mxu0 0.0
        %1512 = vmatprep.subr.mxu0 0.0
        %1513 = vmatpush1.msra.mxu0 0.0
        %1514 = vmatprep.subr.mxu0 0.0
        %1515 = vmatpush1.msra.mxu0 0.0
        %1516 = vmatprep.subr.mxu0 0.0
        %1517 = vmatpush1.msra.mxu0 0.0
        %1518 = vmatprep.subr.mxu0 0.0
        %1519 = vmatpush1.msra.mxu0 %v1483
        %1520 = vmatprep.subr.mxu0 0.0
        %1521 = vmatpush2.msra.mxu0 0.0
        %1522 = vmatprep.subr.mxu0 0.0
        %1523 = vmatpush2.msra.mxu0 0.0
        %1524 = vmatprep.subr.mxu0 0.0
        %1525 = vmatpush2.msra.mxu0 0.0
        %1526 = vmatprep.subr.mxu0 0.0
        %1527 = vmatpush2.msra.mxu0 0.0
        %1528 = vmatprep.subr.mxu0 0.0
        %1529 = vmatpush2.msra.mxu0 0.0
        %1530 = vmatprep.subr.mxu0 0.0
        %1531 = vmatpush2.msra.mxu0 0.0
        %1532 = vmatprep.subr.mxu0 0.0
        %1533 = vmatpush2.msra.mxu0 0.0
        %1534 = vmatprep.subr.mxu0 0.0
        %1535 = vmatpush2.msra.mxu0 0.0
        %1536 = vmatprep.subr.mxu0 0.0
        %1537 = vmatpush2.msra.mxu0 0.0
        %1538 = vmatprep.subr.mxu0 0.0
        %1539 = vmatpush2.msra.mxu0 0.0
        %1540 = vmatprep.subr.mxu0 0.0
        %1541 = vmatpush2.msra.mxu0 0.0
        %1542 = vmatprep.subr.mxu0 0.0
        %1543 = vmatpush2.msra.mxu0 0.0
        %1544 = vmatprep.subr.mxu0 0.0
        %1545 = vmatpush2.msra.mxu0 0.0
        %1546 = vmatprep.subr.mxu0 0.0
        %1547 = vmatpush2.msra.mxu0 0.0
        %1548 = vmatprep.subr.mxu0 0.0
        %1549 = vmatpush2.msra.mxu0 0.0
        %1550 = vmatprep.subr.mxu0 0.0
        %1551 = vmatpush2.msra.mxu0 0.0
        %1552 = vmatprep.mubr.f32.mxu0 0.0
        %1553 = vmatmul.mubr.f32.gmra.mxu0 %v1486
        %v1554 = vpop.f32.mrf.mxu0
        %v1555 = vadd.f32 0.0, %v1554
        %v1556 = vpop.f32.mrf.mxu0
        %1557 = vdwg.mxu0
        %v1558 = vld [vmem:[#allocation10 + $0x18] sm:$0xff]
        %v1560 = vsel %vm674, %v1555, 0
        %1562 = vmatprep.subr.mxu0 0.0
        %1563 = vmatpush1.msra.mxu0 0.0
        %1564 = vmatprep.subr.mxu0 0.0
        %1565 = vmatpush1.msra.mxu0 0.0
        %1566 = vmatprep.subr.mxu0 0.0
        %1567 = vmatpush1.msra.mxu0 0.0
        %1568 = vmatprep.subr.mxu0 0.0
        %1569 = vmatpush1.msra.mxu0 0.0
        %1570 = vmatprep.subr.mxu0 0.0
        %1571 = vmatpush1.msra.mxu0 0.0
        %1572 = vmatprep.subr.mxu0 0.0
        %1573 = vmatpush1.msra.mxu0 0.0
        %1574 = vmatprep.subr.mxu0 0.0
        %1575 = vmatpush1.msra.mxu0 0.0
        %1576 = vmatprep.subr.mxu0 0.0
        %1577 = vmatpush1.msra.mxu0 0.0
        %1578 = vmatprep.subr.mxu0 0.0
        %1579 = vmatpush1.msra.mxu0 0.0
        %1580 = vmatprep.subr.mxu0 0.0
        %1581 = vmatpush1.msra.mxu0 0.0
        %1582 = vmatprep.subr.mxu0 0.0
        %1583 = vmatpush1.msra.mxu0 0.0
        %1584 = vmatprep.subr.mxu0 0.0
        %1585 = vmatpush1.msra.mxu0 0.0
        %1586 = vmatprep.subr.mxu0 0.0
        %1587 = vmatpush1.msra.mxu0 0.0
        %1588 = vmatprep.subr.mxu0 0.0
        %1589 = vmatpush1.msra.mxu0 0.0
        %1590 = vmatprep.subr.mxu0 0.0
        %1591 = vmatpush1.msra.mxu0 0.0
        %1592 = vmatprep.subr.mxu0 0.0
        %1593 = vmatpush1.msra.mxu0 %v1558
        %1594 = vmatprep.subr.mxu0 0.0
        %1595 = vmatpush2.msra.mxu0 0.0
        %1596 = vmatprep.subr.mxu0 0.0
        %1597 = vmatpush2.msra.mxu0 0.0
        %1598 = vmatprep.subr.mxu0 0.0
        %1599 = vmatpush2.msra.mxu0 0.0
        %1600 = vmatprep.subr.mxu0 0.0
        %1601 = vmatpush2.msra.mxu0 0.0
        %1602 = vmatprep.subr.mxu0 0.0
        %1603 = vmatpush2.msra.mxu0 0.0
        %1604 = vmatprep.subr.mxu0 0.0
        %1605 = vmatpush2.msra.mxu0 0.0
        %1606 = vmatprep.subr.mxu0 0.0
        %1607 = vmatpush2.msra.mxu0 0.0
        %1608 = vmatprep.subr.mxu0 0.0
        %1609 = vmatpush2.msra.mxu0 0.0
        %1610 = vmatprep.subr.mxu0 0.0
        %1611 = vmatpush2.msra.mxu0 0.0
        %1612 = vmatprep.subr.mxu0 0.0
        %1613 = vmatpush2.msra.mxu0 0.0
        %1614 = vmatprep.subr.mxu0 0.0
        %1615 = vmatpush2.msra.mxu0 0.0
        %1616 = vmatprep.subr.mxu0 0.0
        %1617 = vmatpush2.msra.mxu0 0.0
        %1618 = vmatprep.subr.mxu0 0.0
        %1619 = vmatpush2.msra.mxu0 0.0
        %1620 = vmatprep.subr.mxu0 0.0
        %1621 = vmatpush2.msra.mxu0 0.0
        %1622 = vmatprep.subr.mxu0 0.0
        %1623 = vmatpush2.msra.mxu0 0.0
        %1624 = vmatprep.subr.mxu0 0.0
        %1625 = vmatpush2.msra.mxu0 0.0
        %1626 = vmatprep.mubr.f32.mxu0 0.0
        %1627 = vmatmul.mubr.f32.gmra.mxu0 %v1560
        %v1628 = vpop.f32.mrf.mxu0
        %v1629 = vadd.f32 0.0, %v1628
        %v1630 = vpop.f32.mrf.mxu0
        %1631 = vdwg.mxu0
        %v1632 = vadd.f32 %v1391, %v1629
        %v1633 = vld [vmem:[%s8] sm:$0x1]
        %v1635 = vlaneseq
        %v1636 = vshrl.u32 %v1635, 7
        %v1637 = vsub.s32 0, %v1636
        %v1638 = vrot.slane %v1633, %v1637
        %v1640 = vadd.f32 %v1632, %v1638
        %1641 = vst.msk [vmem:[%s419] sm:$0xff] %vm435, %v1640
        %s1642 = sand.u32 %s244, 1
        %s1643 = scalar_lea.sflag [#allocation4], %s1642
        %s1644 = sand.u32 %s244, 1
        %s1645 = smul.addr %s1644, 8
        %s1646 = scalar_lea.vmem [#allocation11], %s1645
        // Predicated region
        $region77: #{tpu_custom_call.1} parent=55 // pred_check
          %p1647 = pneg %p254
        $region78: #{tpu_custom_call.1} parent=55 // pred_check_branch
          %1649 = sbr.rel (%p1647) target = $region80
        $region79: #{tpu_custom_call.1} parent=55 // pred_region
          %s1651 = ssub.s32 128, 128
          %1652 = vsyncadd %s1643, %s1651
          %s1653 = sadd.s32 %s33, %s32
          %s1654 = smul.addr %s1653, 128
          %s1655 = scalar_lea.hbm %s9, %s1654
          %s1657 = sshll.u32 %s1646, 4
          %s1658 = int_to_ptr.vmem [resolvable:$true] %s1657
          %1660 = dma.vmem_to_hbm [thread:$0]  %s1658, 128, %s1655, %s1643
        $region80: #{tpu_custom_call.1} parent=55 // pred_fallthru
          _
      $region56: #{tpu_custom_call.1} parent=5 // pred_fallthru
        _
      %p1661 = scmp.le.s32.totalorder 2, %s23
      // Predicated region
      $region81: #{tpu_custom_call.1} parent=5 // pred_check
        %p1662 = pneg %p1661
      $region82: #{tpu_custom_call.1} parent=5 // pred_check_branch
        %1664 = sbr.rel (%p1662) target = $region84
      $region83: #{tpu_custom_call.1} parent=5 // pred_region
        %s1665 = ssub.s32 %s23, 2
        // Predicated region
        $region85: #{tpu_custom_call.1} parent=83 // pred_check
          %p1666 = pneg %p260
        $region86: #{tpu_custom_call.1} parent=83 // pred_check_branch
          %1668 = sbr.rel (%p1666) target = $region88
        $region87: #{tpu_custom_call.1} parent=83 // pred_region
          %s1669 = sand.u32 %s245, 1
          %s1670 = scalar_lea.sflag [#allocation4], %s1669
          %s1671 = sand.u32 %s245, 1
          %s1672 = smul.addr %s1671, 8
          %s1673 = scalar_lea.vmem [#allocation11], %s1672
          %1674 = dma.done %s1670, 128
        $region88: #{tpu_custom_call.1} parent=83 // pred_fallthru
          _
      $region84: #{tpu_custom_call.1} parent=5 // pred_fallthru
        _
    $region6: #{tpu_custom_call.1} parent=1 // loop_footer
      %s27 = sadd.s32 1, %s23
    $region7: #{tpu_custom_call.1} parent=1 // loop_footer_branch
      %22 = sbr.rel target = $region3
    $region8: #{tpu_custom_call.1} parent=1 // loop_exit
      _
    %1675 = vsyncpa [#allocation3], 1
    %s1676 = scalar_lea.sflag [#allocation3], 1
    %1677 = vsyncpa %s1676, 1
    %1678 = vsyncpa [#allocation6], 1
    %1679 = vsyncpa [#allocation9], 1
    %1680 = vsyncpa [#allocation4], 1
    %s1681 = scalar_lea.sflag [#allocation4], 1
    %1682 = vsyncpa %s1681, 1

</llo_original>
